<compile_context>
chip_gen: v6e
topology: v6e:2x2x1
jax: 0.10.0
libtpu: 0.0.40
codegen_flags: <defaults>
</compile_context>

<pallas_src>
import math
import numpy as np
import jax
import jax.numpy as jnp
from jax.experimental import pallas as pl
from jax.experimental.pallas import tpu as pltpu


_POOL_CFGS = (  # (kernel, stride, padding) for pol1..pol4
    (2, 2, 0),
    (3, 2, 0),
    (5, 2, 1),
    (6, 2, 2),
)


def _pool_out_size(L, k, s, pad):
    o = int(math.ceil((L + 2 * pad - k) / s)) + 1
    # PyTorch ceil_mode rule: last window must start inside input (or left pad)
    if (o - 1) * s >= L + pad:
        o -= 1
    return o


def _pool_matrix(L, k, s, pad):
    """A with shape (o, L): 1-D avg-pool (ceil_mode=True, count_include_pad=False)."""
    o = _pool_out_size(L, k, s, pad)
    A = np.zeros((o, L), np.float32)
    for i in range(o):
        st = i * s - pad
        en = min(st + k, L + pad)
        st_c, en_c = max(st, 0), min(en, L)
        A[i, st_c:en_c] = 1.0 / float(en_c - st_c)
    return A


def _m_pol_kernel(x_ref, f_ref, other_ref, o_ref):
    # x_ref:     (bn, C_in*H*W)          bf16   lane-dense input rows
    # f_ref:     (C_in*H*W, C_out*Ho*Wo) bf16   fused conv1x1 + sum-of-pools matrix
    # other_ref: (bn, C_out*Ho*Wo)       bf16
    # o_ref:     (bn, C_out*Ho*Wo)       x.dtype
    y = jnp.dot(x_ref[...], f_ref[...], preferred_element_type=jnp.float32)
    y = y + other_ref[...].astype(jnp.float32)
    o_ref[...] = jnp.maximum(y, 0.0).astype(o_ref.dtype)


def _pick_bn(N, row_bytes, budget_bytes=8 << 20):
    """Batch rows per grid step.

    Targets a multi-MiB per-step working set (kernel is HBM/grid-overhead bound),
    keeps >= 2 grid steps when N allows (v7x has 2 TensorCores), keeps blocks
    sublane-aligned (multiple of 8) unless the block covers all of N, and allows
    a ragged final block (no N % bn == 0 requirement -> no prime-N bn=1 cliff).
    """
    bn = max(1, budget_bytes // max(1, 2 * row_bytes))   # x2: double-buffered pipeline
    bn = min(bn, 1024)
    if N > 1:
        bn = min(bn, -(-N // 2))          # ceil(N/2): keep >= 2 grid steps
    bn = min(bn, N)
    if bn != N:
        bn = min(N, max(8, (bn // 8) * 8))  # (8,128) block rule unless full-N block
    return bn


def m_pol_forward(x, other, conv_weight):
    """x: (N,C_in,H,W), other: (N,C_out,Ho,Wo), conv_weight: (C_out,C_in,1,1)."""
    N, C_in, H, W = x.shape
    C_out = conv_weight.shape[0]

    # ---- host side: fold conv1x1 + the 4 ceil-mode avg-pools + their sum into one matrix ----
    B = None
    out_hw = None
    for k, s, pad in _POOL_CFGS:
        Ah = _pool_matrix(H, k, s, pad)            # (Ho, H)
        Aw = _pool_matrix(W, k, s, pad)            # (Wo, W)
        if out_hw is None:
            out_hw = (Ah.shape[0], Aw.shape[0])
        assert out_hw == (Ah.shape[0], Aw.shape[0]), "pool output sizes must match"
        Bk = np.kron(Ah, Aw)                       # (Ho*Wo, H*W)
        B = Bk if B is None else B + Bk
    Ho, Wo = out_hw
    assert other.shape == (N, C_out, Ho, Wo)
    d_in = C_in * H * W
    d_out = C_out * Ho * Wo

    # TODO(synk): for large spatial sizes (dense fused matrix > ~8 MiB) switch back to
    # the separable Ah/Aw two-matmul path instead of the dense kron matrix.
    assert d_in * d_out * 2 <= (8 << 20), "dense fused-matrix path not suitable for this H*W"

    # fused[ci*H*W + q, co*Ho*Wo + p] = w[co, ci] * B[p, q]   (exact by linearity)
    w2 = conv_weight.reshape(C_out, C_in).astype(jnp.float32)
    fused = jnp.einsum("oc,pq->cqop", w2, jnp.asarray(B, jnp.float32))
    fused = fused.reshape(d_in, d_out).astype(jnp.bfloat16)

    # Lane/burst-dense operands: d_in (=C_in*H*W) lanes for x, d_out for other/out.
    x_flat = x.reshape(N, d_in).astype(jnp.bfloat16)
    other_flat = other.reshape(N, d_out).astype(jnp.bfloat16)  # bf16 halves its HBM traffic

    out_itemsize = jnp.dtype(x.dtype).itemsize
    row_bytes = d_in * 2 + d_out * 2 + d_out * out_itemsize
    bn = _pick_bn(N, row_bytes)
    grid = (pl.cdiv(N, bn),)

    out_flat = pl.pallas_call(
        _m_pol_kernel,
        out_shape=jax.ShapeDtypeStruct((N, d_out), x.dtype),
        grid=grid,
        in_specs=[
            pl.BlockSpec((bn, d_in), lambda n: (n, 0)),
            pl.BlockSpec((d_in, d_out), lambda n: (0, 0)),   # grid-invariant fused matrix
            pl.BlockSpec((bn, d_out), lambda n: (n, 0)),
        ],
        out_specs=pl.BlockSpec((bn, d_out), lambda n: (n, 0)),
        compiler_params=pltpu.CompilerParams(
            dimension_semantics=("parallel",),
            vmem_limit_bytes=32 * 1024 * 1024,   # > v5e 16 MiB scoped default, < v7x 64 MiB
        ),
    )(x_flat, fused, other_flat)
    return out_flat.reshape(N, C_out, Ho, Wo)


# ---------------- pure NumPy reference (PyTorch AvgPool2d semantics) ----------------
def _ref_avg_pool(x, k, s, pad):
    N, C, H, W = x.shape
    Ho, Wo = _pool_out_size(H, k, s, pad), _pool_out_size(W, k, s, pad)
    out = np.zeros((N, C, Ho, Wo), np.float32)
    for i in range(Ho):
        hs = i * s - pad
        he = min(hs + k, H + pad)
        hs_c, he_c = max(hs, 0), min(he, H)
        for j in range(Wo):
            ws = j * s - pad
            we = min(ws + k, W + pad)
            ws_c, we_c = max(ws, 0), min(we, W)
            cnt = (he_c - hs_c) * (we_c - ws_c)  # count_include_pad=False
            out[:, :, i, j] = x[:, :, hs_c:he_c, ws_c:we_c].sum(axis=(2, 3)) / cnt
    return out


def _ref_forward(x, other, conv_weight):
    x = np.asarray(x, np.float32)
    other = np.asarray(other, np.float32)
    w = np.asarray(conv_weight, np.float32).reshape(conv_weight.shape[0], conv_weight.shape[1])
    y = np.einsum("oc,nchw->nohw", w, x)
    pooled = sum(_ref_avg_pool(y, k, s, p) for k, s, p in _POOL_CFGS)
    return np.maximum(pooled + other, 0.0)


if __name__ == "__main__":
    N, C_in, C_out, H, W = 2, 4, 8, 16, 16
    Ho = _pool_out_size(H, *_POOL_CFGS[0])
    Wo = _pool_out_size(W, *_POOL_CFGS[0])

    key = jax.random.PRNGKey(0)
    kx, kw, ko = jax.random.split(key, 3)
    x = jax.random.normal(kx, (N, C_in, H, W), jnp.float32)
    # deterministic "checkpoint": Conv2d(C_in, C_out, 1, bias=False) weight
    conv_weight = jax.random.normal(kw, (C_out, C_in, 1, 1), jnp.float32) * 0.5
    other = jax.random.normal(ko, (N, C_out, Ho, Wo), jnp.float32)

    out = m_pol_forward(x, other, conv_weight)
    out = jax.block_until_ready(out)

    ref = _ref_forward(x, other, conv_weight)
    # bf16 operands (x, fused matrix, other) with f32 accumulation -> loosened tolerance.
    np.testing.assert_allclose(np.asarray(out), ref, rtol=5e-2, atol=1e-1)
    print("KERNEL_OK")
</pallas_src>

<mosaic_0001>
module attributes {stable_mosaic.version = 11 : i64} {
  func.func @_m_pol_kernel(%arg0: i32, %arg1: memref<2x1024xbf16, #tpu.memory_space<vmem>>, %arg2: memref<1024x512xbf16, #tpu.memory_space<vmem>>, %arg3: memref<2x512xbf16, #tpu.memory_space<vmem>>, %arg4: memref<2x512xf32, #tpu.memory_space<vmem>>) attributes {dimension_semantics = [#tpu.dimension_semantics<parallel>], iteration_bounds = array<i64: 1>, scalar_prefetch = 0 : i64, scratch_operands = 0 : i64, tpu.core_type = #tpu.core_type<tc>, window_params = [{transform_indices = @transform_0, window_bounds = array<i64: 2, 1024>}, {pipeline_mode = #tpu.pipeline_mode<synchronous>, transform_indices = @transform_1, window_bounds = array<i64: 1024, 512>}, {transform_indices = @transform_2, window_bounds = array<i64: 2, 512>}, {transform_indices = @transform_3, window_bounds = array<i64: 2, 512>}]} {
    %c0 = arith.constant 0 : index
    %c0_0 = arith.constant 0 : index
    %0 = vector.load %arg1[%c0, %c0_0] : memref<2x1024xbf16, #tpu.memory_space<vmem>>, vector<2x1024xbf16>
    %c0_1 = arith.constant 0 : index
    %c0_2 = arith.constant 0 : index
    %1 = vector.load %arg2[%c0_1, %c0_2] : memref<1024x512xbf16, #tpu.memory_space<vmem>>, vector<1024x512xbf16>
    %cst = arith.constant dense<0.000000e+00> : vector<2x512xf32>
    %2 = tpu.matmul %0, %1, %cst {dimension_numbers = #tpu.dot_dimension_numbers<[1], [0], [0], [1], [0, 0, 1, 1], [], []>} : vector<2x1024xbf16>, vector<1024x512xbf16>, vector<2x512xf32> -> vector<2x512xf32>
    %c0_3 = arith.constant 0 : index
    %c0_4 = arith.constant 0 : index
    %3 = vector.load %arg3[%c0_3, %c0_4] : memref<2x512xbf16, #tpu.memory_space<vmem>>, vector<2x512xbf16>
    %4 = arith.extf %3 : vector<2x512xbf16> to vector<2x512xf32>
    %5 = arith.addf %2, %4 : vector<2x512xf32>
    %cst_5 = arith.constant 0.000000e+00 : f32
    %6 = vector.broadcast %cst_5 : f32 to vector<2x512xf32>
    %7 = arith.maximumf %5, %6 : vector<2x512xf32>
    %c0_6 = arith.constant 0 : index
    %c0_7 = arith.constant 0 : index
    %8 = vector.load %arg4[%c0_6, %c0_7] : memref<2x512xf32, #tpu.memory_space<vmem>>, vector<2x512xf32>
    tpu.vector_store %arg4[%c0_6, %c0_7], %7 {strides = array<i32>} : memref<2x512xf32, #tpu.memory_space<vmem>>, vector<2x512xf32>,
    return
  }
  func.func @transform_0(%arg0: i32) -> (i32, i32) {
    %c0_i32 = arith.constant 0 : i32
    %c0_i32_0 = arith.constant 0 : i32
    return %arg0, %c0_i32 : i32, i32
  }
  func.func @transform_1(%arg0: i32) -> (i32, i32) {
    %c0_i32 = arith.constant 0 : i32
    %c0_i32_0 = arith.constant 0 : i32
    %c0_i32_1 = arith.constant 0 : i32
    return %c0_i32, %c0_i32_0 : i32, i32
  }
  func.func @transform_2(%arg0: i32) -> (i32, i32) {
    %c0_i32 = arith.constant 0 : i32
    %c0_i32_0 = arith.constant 0 : i32
    return %arg0, %c0_i32 : i32, i32
  }
  func.func @transform_3(%arg0: i32) -> (i32, i32) {
    %c0_i32 = arith.constant 0 : i32
    %c0_i32_0 = arith.constant 0 : i32
    return %arg0, %c0_i32 : i32, i32
  }
}

</mosaic_0001>

<llo_original>
// kernel: tpu_custom_call.1
$region0: #{tpu_custom_call.1}
  #allocation0 [shape = 'u32[]', space=smem, size = 0x4, offset = 0x4, fixed_abs, tag = 'smem constant byte address 0x4 - core index']
  #allocation1 [shape = 'u32[144,128]{1,0:T(1,128)}', space=vmem, size = 0x12000, scoped, tag = 'internal scratch']
  %s0 = inlined_call_operand.hbm [shape: bf16[2,1024], index: 0, kind: input, shape index: {}]
  %s1 = inlined_call_operand.hbm [shape: bf16[1024,512], index: 1, kind: input, shape index: {}]
  %s2 = inlined_call_operand.hbm [shape: bf16[2,512], index: 2, kind: input, shape index: {}]
  %s3 = inlined_call_operand.hbm [shape: f32[2,512], index: 3, kind: output, shape index: {}]
  %s4 = sld [smem:[#allocation0]]
  $region34: #{tpu_custom_call.1} parent=0
    _
  %s6 = ssub.s32 1, %s4
  %s7 = scalar_select 0, %s6, %s4
  $region1: #{tpu_custom_call.1} parent=0
    #allocation2 [shape = 'u8[4096]{0}', space=vmem, size = 0x1000, scoped, tag = 'input window, operand 0, single buffered']
    #allocation3 [shape = 's32[1]{0}', space=sflag, size = 0x4, scoped, tag = 'scoped memory for tpu_custom_call.1']
    #allocation4 [shape = 's32[1]{0}', space=sflag, size = 0x4, scoped, tag = 'scoped memory for tpu_custom_call.1']
    #allocation5 [shape = 'u8[1048576]{0}', space=vmem, size = 0x100000, scoped, tag = 'input window, operand 1, single buffered']
    #allocation6 [shape = 's32[1]{0}', space=sflag, size = 0x4, scoped, tag = 'scoped memory for tpu_custom_call.1']
    #allocation7 [shape = 'u8[2048]{0}', space=vmem, size = 0x800, scoped, tag = 'input window, operand 2, single buffered']
    #allocation8 [shape = 'u8[4096]{0}', space=vmem, size = 0x1000, scoped, tag = 'output window, operand 0, single buffered']
    %8 = vsyncpa [#allocation3], 0
    %9 = vsyncpa [#allocation6], 0
    %10 = vsyncpa [#allocation4], 0
    // Predicated region
    $region2: #{tpu_custom_call.1} parent=1 // pred_check
      _
    $region3: #{tpu_custom_call.1} parent=1 // pred_check_branch
      %12 = sbr.rel (0) target = $region5
    $region4: #{tpu_custom_call.1} parent=1 // pred_region
      %s14 = ssub.s32 128, 128
      %15 = vsyncadd [#allocation3], %s14
      %s17 = sshll.u32 [#allocation2], 4
      %s18 = int_to_ptr.vmem [resolvable:$true] %s17
      %20 = dma.hbm_to_vmem [thread:$0]  %s0, 128, %s18, [#allocation3]
    $region5: #{tpu_custom_call.1} parent=1 // pred_fallthru
      _
    // Predicated region
    $region6: #{tpu_custom_call.1} parent=1 // pred_check
      _
    $region7: #{tpu_custom_call.1} parent=1 // pred_check_branch
      %22 = sbr.rel (0) target = $region9
    $region8: #{tpu_custom_call.1} parent=1 // pred_region
      %s24 = ssub.s32 32768, 32768
      %25 = vsyncadd [#allocation6], %s24
      %s26 = sshll.u32 [#allocation5], 4
      %s27 = int_to_ptr.vmem [resolvable:$true] %s26
      %32 = dma.hbm_to_vmem [thread:$0]  %s1, 32768, %s27, [#allocation6], 256, 256, 16
    $region9: #{tpu_custom_call.1} parent=1 // pred_fallthru
      _
    // Predicated region
    $region10: #{tpu_custom_call.1} parent=1 // pred_check
      _
    $region11: #{tpu_custom_call.1} parent=1 // pred_check_branch
      %34 = sbr.rel (0) target = $region13
    $region12: #{tpu_custom_call.1} parent=1 // pred_region
      %s36 = ssub.s32 64, 64
      %37 = vsyncadd [#allocation6], %s36
      %s39 = sshll.u32 [#allocation7], 4
      %s40 = int_to_ptr.vmem [resolvable:$true] %s39
      %42 = dma.hbm_to_vmem [thread:$0]  %s2, 64, %s40, [#allocation6]
    $region13: #{tpu_custom_call.1} parent=1 // pred_fallthru
      _
    // Predicated region
    $region14: #{tpu_custom_call.1} parent=1 // pred_check
      _
    $region15: #{tpu_custom_call.1} parent=1 // pred_check_branch
      %44 = sbr.rel (0) target = $region17
    $region16: #{tpu_custom_call.1} parent=1 // pred_region
      %45 = dma.done [#allocation3], 128
    $region17: #{tpu_custom_call.1} parent=1 // pred_fallthru
      _
    // Predicated region
    $region18: #{tpu_custom_call.1} parent=1 // pred_check
      _
    $region19: #{tpu_custom_call.1} parent=1 // pred_check_branch
      %47 = sbr.rel (0) target = $region21
    $region20: #{tpu_custom_call.1} parent=1 // pred_region
      %48 = dma.done [#allocation6], 32768
    $region21: #{tpu_custom_call.1} parent=1 // pred_fallthru
      _
    // Predicated region
    $region22: #{tpu_custom_call.1} parent=1 // pred_check
      _
    $region23: #{tpu_custom_call.1} parent=1 // pred_check_branch
      %50 = sbr.rel (0) target = $region25
    $region24: #{tpu_custom_call.1} parent=1 // pred_region
      %51 = dma.done [#allocation6], 64
    $region25: #{tpu_custom_call.1} parent=1 // pred_fallthru
      _
    %v52 = vld [vmem:[#allocation2] sm:$0xff]
    %v53 = vld [vmem:[#allocation5] sm:$0xff]
    %v54 = vld [vmem:[#allocation5 + $0x8] sm:$0xff]
    %v55 = vld [vmem:[#allocation5 + $0x10] sm:$0xff]
    %v56 = vld [vmem:[#allocation5 + $0x18] sm:$0xff]
    %v57 = vld [vmem:[#allocation5 + $0x20] sm:$0xff]
    %v58 = vld [vmem:[#allocation5 + $0x28] sm:$0xff]
    %v59 = vld [vmem:[#allocation5 + $0x30] sm:$0xff]
    %v60 = vld [vmem:[#allocation5 + $0x38] sm:$0xff]
    %v61 = vld [vmem:[#allocation5 + $0x40] sm:$0xff]
    %v62 = vld [vmem:[#allocation5 + $0x48] sm:$0xff]
    %v63 = vld [vmem:[#allocation5 + $0x50] sm:$0xff]
    %v64 = vld [vmem:[#allocation5 + $0x58] sm:$0xff]
    %v65 = vld [vmem:[#allocation5 + $0x60] sm:$0xff]
    %v66 = vld [vmem:[#allocation5 + $0x68] sm:$0xff]
    %v67 = vld [vmem:[#allocation5 + $0x70] sm:$0xff]
    %v68 = vld [vmem:[#allocation5 + $0x78] sm:$0xff]
    %v69 = vld [vmem:[#allocation5 + $0x80] sm:$0xff]
    %v70 = vld [vmem:[#allocation5 + $0x88] sm:$0xff]
    %v71 = vld [vmem:[#allocation5 + $0x90] sm:$0xff]
    %v72 = vld [vmem:[#allocation5 + $0x98] sm:$0xff]
    %v73 = vld [vmem:[#allocation5 + $0xa0] sm:$0xff]
    %v74 = vld [vmem:[#allocation5 + $0xa8] sm:$0xff]
    %v75 = vld [vmem:[#allocation5 + $0xb0] sm:$0xff]
    %v76 = vld [vmem:[#allocation5 + $0xb8] sm:$0xff]
    %v77 = vld [vmem:[#allocation5 + $0xc0] sm:$0xff]
    %v78 = vld [vmem:[#allocation5 + $0xc8] sm:$0xff]
    %v79 = vld [vmem:[#allocation5 + $0xd0] sm:$0xff]
    %v80 = vld [vmem:[#allocation5 + $0xd8] sm:$0xff]
    %v81 = vld [vmem:[#allocation5 + $0xe0] sm:$0xff]
    %v82 = vld [vmem:[#allocation5 + $0xe8] sm:$0xff]
    %v83 = vld [vmem:[#allocation5 + $0xf0] sm:$0xff]
    %v84 = vld [vmem:[#allocation5 + $0xf8] sm:$0xff]
    %v85 = vld [vmem:[#allocation5 + $0x100] sm:$0xff]
    %v86 = vld [vmem:[#allocation5 + $0x108] sm:$0xff]
    %v87 = vld [vmem:[#allocation5 + $0x110] sm:$0xff]
    %v88 = vld [vmem:[#allocation5 + $0x118] sm:$0xff]
    %v89 = vld [vmem:[#allocation5 + $0x120] sm:$0xff]
    %v90 = vld [vmem:[#allocation5 + $0x128] sm:$0xff]
    %v91 = vld [vmem:[#allocation5 + $0x130] sm:$0xff]
    %v92 = vld [vmem:[#allocation5 + $0x138] sm:$0xff]
    %v93 = vld [vmem:[#allocation5 + $0x140] sm:$0xff]
    %v94 = vld [vmem:[#allocation5 + $0x148] sm:$0xff]
    %v95 = vld [vmem:[#allocation5 + $0x150] sm:$0xff]
    %v96 = vld [vmem:[#allocation5 + $0x158] sm:$0xff]
    %v97 = vld [vmem:[#allocation5 + $0x160] sm:$0xff]
    %v98 = vld [vmem:[#allocation5 + $0x168] sm:$0xff]
    %v99 = vld [vmem:[#allocation5 + $0x170] sm:$0xff]
    %v100 = vld [vmem:[#allocation5 + $0x178] sm:$0xff]
    %v101 = vld [vmem:[#allocation5 + $0x180] sm:$0xff]
    %v102 = vld [vmem:[#allocation5 + $0x188] sm:$0xff]
    %v103 = vld [vmem:[#allocation5 + $0x190] sm:$0xff]
    %v104 = vld [vmem:[#allocation5 + $0x198] sm:$0xff]
    %v105 = vld [vmem:[#allocation5 + $0x1a0] sm:$0xff]
    %v106 = vld [vmem:[#allocation5 + $0x1a8] sm:$0xff]
    %v107 = vld [vmem:[#allocation5 + $0x1b0] sm:$0xff]
    %v108 = vld [vmem:[#allocation5 + $0x1b8] sm:$0xff]
    %v109 = vld [vmem:[#allocation5 + $0x1c0] sm:$0xff]
    %v110 = vld [vmem:[#allocation5 + $0x1c8] sm:$0xff]
    %v111 = vld [vmem:[#allocation5 + $0x1d0] sm:$0xff]
    %v112 = vld [vmem:[#allocation5 + $0x1d8] sm:$0xff]
    %v113 = vld [vmem:[#allocation5 + $0x1e0] sm:$0xff]
    %v114 = vld [vmem:[#allocation5 + $0x1e8] sm:$0xff]
    %v115 = vld [vmem:[#allocation5 + $0x1f0] sm:$0xff]
    %v116 = vld [vmem:[#allocation5 + $0x1f8] sm:$0xff]
    %v117 = vld [vmem:[#allocation5 + $0x200] sm:$0xff]
    %v118 = vld [vmem:[#allocation5 + $0x208] sm:$0xff]
    %v119 = vld [vmem:[#allocation5 + $0x210] sm:$0xff]
    %v120 = vld [vmem:[#allocation5 + $0x218] sm:$0xff]
    %v121 = vld [vmem:[#allocation5 + $0x220] sm:$0xff]
    %v122 = vld [vmem:[#allocation5 + $0x228] sm:$0xff]
    %v123 = vld [vmem:[#allocation5 + $0x230] sm:$0xff]
    %v124 = vld [vmem:[#allocation5 + $0x238] sm:$0xff]
    %v125 = vld [vmem:[#allocation5 + $0x240] sm:$0xff]
    %v126 = vld [vmem:[#allocation5 + $0x248] sm:$0xff]
    %v127 = vld [vmem:[#allocation5 + $0x250] sm:$0xff]
    %v128 = vld [vmem:[#allocation5 + $0x258] sm:$0xff]
    %v129 = vld [vmem:[#allocation5 + $0x260] sm:$0xff]
    %v130 = vld [vmem:[#allocation5 + $0x268] sm:$0xff]
    %v131 = vld [vmem:[#allocation5 + $0x270] sm:$0xff]
    %v132 = vld [vmem:[#allocation5 + $0x278] sm:$0xff]
    %v133 = vld [vmem:[#allocation5 + $0x280] sm:$0xff]
    %v134 = vld [vmem:[#allocation5 + $0x288] sm:$0xff]
    %v135 = vld [vmem:[#allocation5 + $0x290] sm:$0xff]
    %v136 = vld [vmem:[#allocation5 + $0x298] sm:$0xff]
    %v137 = vld [vmem:[#allocation5 + $0x2a0] sm:$0xff]
    %v138 = vld [vmem:[#allocation5 + $0x2a8] sm:$0xff]
    %v139 = vld [vmem:[#allocation5 + $0x2b0] sm:$0xff]
    %v140 = vld [vmem:[#allocation5 + $0x2b8] sm:$0xff]
    %v141 = vld [vmem:[#allocation5 + $0x2c0] sm:$0xff]
    %v142 = vld [vmem:[#allocation5 + $0x2c8] sm:$0xff]
    %v143 = vld [vmem:[#allocation5 + $0x2d0] sm:$0xff]
    %v144 = vld [vmem:[#allocation5 + $0x2d8] sm:$0xff]
    %v145 = vld [vmem:[#allocation5 + $0x2e0] sm:$0xff]
    %v146 = vld [vmem:[#allocation5 + $0x2e8] sm:$0xff]
    %v147 = vld [vmem:[#allocation5 + $0x2f0] sm:$0xff]
    %v148 = vld [vmem:[#allocation5 + $0x2f8] sm:$0xff]
    %v149 = vld [vmem:[#allocation5 + $0x300] sm:$0xff]
    %v150 = vld [vmem:[#allocation5 + $0x308] sm:$0xff]
    %v151 = vld [vmem:[#allocation5 + $0x310] sm:$0xff]
    %v152 = vld [vmem:[#allocation5 + $0x318] sm:$0xff]
    %v153 = vld [vmem:[#allocation5 + $0x320] sm:$0xff]
    %v154 = vld [vmem:[#allocation5 + $0x328] sm:$0xff]
    %v155 = vld [vmem:[#allocation5 + $0x330] sm:$0xff]
    %v156 = vld [vmem:[#allocation5 + $0x338] sm:$0xff]
    %v157 = vld [vmem:[#allocation5 + $0x340] sm:$0xff]
    %v158 = vld [vmem:[#allocation5 + $0x348] sm:$0xff]
    %v159 = vld [vmem:[#allocation5 + $0x350] sm:$0xff]
    %v160 = vld [vmem:[#allocation5 + $0x358] sm:$0xff]
    %v161 = vld [vmem:[#allocation5 + $0x360] sm:$0xff]
    %v162 = vld [vmem:[#allocation5 + $0x368] sm:$0xff]
    %v163 = vld [vmem:[#allocation5 + $0x370] sm:$0xff]
    %v164 = vld [vmem:[#allocation5 + $0x378] sm:$0xff]
    %v165 = vld [vmem:[#allocation5 + $0x380] sm:$0xff]
    %v166 = vld [vmem:[#allocation5 + $0x388] sm:$0xff]
    %v167 = vld [vmem:[#allocation5 + $0x390] sm:$0xff]
    %v168 = vld [vmem:[#allocation5 + $0x398] sm:$0xff]
    %v169 = vld [vmem:[#allocation5 + $0x3a0] sm:$0xff]
    %v170 = vld [vmem:[#allocation5 + $0x3a8] sm:$0xff]
    %v171 = vld [vmem:[#allocation5 + $0x3b0] sm:$0xff]
    %v172 = vld [vmem:[#allocation5 + $0x3b8] sm:$0xff]
    %v173 = vld [vmem:[#allocation5 + $0x3c0] sm:$0xff]
    %v174 = vld [vmem:[#allocation5 + $0x3c8] sm:$0xff]
    %v175 = vld [vmem:[#allocation5 + $0x3d0] sm:$0xff]
    %v176 = vld [vmem:[#allocation5 + $0x3d8] sm:$0xff]
    %v177 = vld [vmem:[#allocation5 + $0x3e0] sm:$0xff]
    %v178 = vld [vmem:[#allocation5 + $0x3e8] sm:$0xff]
    %v179 = vld [vmem:[#allocation5 + $0x3f0] sm:$0xff]
    %v180 = vld [vmem:[#allocation5 + $0x3f8] sm:$0xff]
    %v181 = vld [vmem:[#allocation5 + $0x400] sm:$0xff]
    %v182 = vld [vmem:[#allocation5 + $0x408] sm:$0xff]
    %v183 = vld [vmem:[#allocation5 + $0x410] sm:$0xff]
    %v184 = vld [vmem:[#allocation5 + $0x418] sm:$0xff]
    %v185 = vld [vmem:[#allocation5 + $0x420] sm:$0xff]
    %v186 = vld [vmem:[#allocation5 + $0x428] sm:$0xff]
    %v187 = vld [vmem:[#allocation5 + $0x430] sm:$0xff]
    %v188 = vld [vmem:[#allocation5 + $0x438] sm:$0xff]
    %v189 = vld [vmem:[#allocation5 + $0x440] sm:$0xff]
    %v190 = vld [vmem:[#allocation5 + $0x448] sm:$0xff]
    %v191 = vld [vmem:[#allocation5 + $0x450] sm:$0xff]
    %v192 = vld [vmem:[#allocation5 + $0x458] sm:$0xff]
    %v193 = vld [vmem:[#allocation5 + $0x460] sm:$0xff]
    %v194 = vld [vmem:[#allocation5 + $0x468] sm:$0xff]
    %v195 = vld [vmem:[#allocation5 + $0x470] sm:$0xff]
    %v196 = vld [vmem:[#allocation5 + $0x478] sm:$0xff]
    %v197 = vld [vmem:[#allocation5 + $0x480] sm:$0xff]
    %v198 = vld [vmem:[#allocation5 + $0x488] sm:$0xff]
    %v199 = vld [vmem:[#allocation5 + $0x490] sm:$0xff]
    %v200 = vld [vmem:[#allocation5 + $0x498] sm:$0xff]
    %v201 = vld [vmem:[#allocation5 + $0x4a0] sm:$0xff]
    %v202 = vld [vmem:[#allocation5 + $0x4a8] sm:$0xff]
    %v203 = vld [vmem:[#allocation5 + $0x4b0] sm:$0xff]
    %v204 = vld [vmem:[#allocation5 + $0x4b8] sm:$0xff]
    %v205 = vld [vmem:[#allocation5 + $0x4c0] sm:$0xff]
    %v206 = vld [vmem:[#allocation5 + $0x4c8] sm:$0xff]
    %v207 = vld [vmem:[#allocation5 + $0x4d0] sm:$0xff]
    %v208 = vld [vmem:[#allocation5 + $0x4d8] sm:$0xff]
    %v209 = vld [vmem:[#allocation5 + $0x4e0] sm:$0xff]
    %v210 = vld [vmem:[#allocation5 + $0x4e8] sm:$0xff]
    %v211 = vld [vmem:[#allocation5 + $0x4f0] sm:$0xff]
    %v212 = vld [vmem:[#allocation5 + $0x4f8] sm:$0xff]
    %v213 = vld [vmem:[#allocation5 + $0x500] sm:$0xff]
    %v214 = vld [vmem:[#allocation5 + $0x508] sm:$0xff]
    %v215 = vld [vmem:[#allocation5 + $0x510] sm:$0xff]
    %v216 = vld [vmem:[#allocation5 + $0x518] sm:$0xff]
    %v217 = vld [vmem:[#allocation5 + $0x520] sm:$0xff]
    %v218 = vld [vmem:[#allocation5 + $0x528] sm:$0xff]
    %v219 = vld [vmem:[#allocation5 + $0x530] sm:$0xff]
    %v220 = vld [vmem:[#allocation5 + $0x538] sm:$0xff]
    %v221 = vld [vmem:[#allocation5 + $0x540] sm:$0xff]
    %v222 = vld [vmem:[#allocation5 + $0x548] sm:$0xff]
    %v223 = vld [vmem:[#allocation5 + $0x550] sm:$0xff]
    %v224 = vld [vmem:[#allocation5 + $0x558] sm:$0xff]
    %v225 = vld [vmem:[#allocation5 + $0x560] sm:$0xff]
    %v226 = vld [vmem:[#allocation5 + $0x568] sm:$0xff]
    %v227 = vld [vmem:[#allocation5 + $0x570] sm:$0xff]
    %v228 = vld [vmem:[#allocation5 + $0x578] sm:$0xff]
    %v229 = vld [vmem:[#allocation5 + $0x580] sm:$0xff]
    %v230 = vld [vmem:[#allocation5 + $0x588] sm:$0xff]
    %v231 = vld [vmem:[#allocation5 + $0x590] sm:$0xff]
    %v232 = vld [vmem:[#allocation5 + $0x598] sm:$0xff]
    %v233 = vld [vmem:[#allocation5 + $0x5a0] sm:$0xff]
    %v234 = vld [vmem:[#allocation5 + $0x5a8] sm:$0xff]
    %v235 = vld [vmem:[#allocation5 + $0x5b0] sm:$0xff]
    %v236 = vld [vmem:[#allocation5 + $0x5b8] sm:$0xff]
    %v237 = vld [vmem:[#allocation5 + $0x5c0] sm:$0xff]
    %v238 = vld [vmem:[#allocation5 + $0x5c8] sm:$0xff]
    %v239 = vld [vmem:[#allocation5 + $0x5d0] sm:$0xff]
    %v240 = vld [vmem:[#allocation5 + $0x5d8] sm:$0xff]
    %v241 = vld [vmem:[#allocation5 + $0x5e0] sm:$0xff]
    %v242 = vld [vmem:[#allocation5 + $0x5e8] sm:$0xff]
    %v243 = vld [vmem:[#allocation5 + $0x5f0] sm:$0xff]
    %v244 = vld [vmem:[#allocation5 + $0x5f8] sm:$0xff]
    %v245 = vld [vmem:[#allocation5 + $0x600] sm:$0xff]
    %v246 = vld [vmem:[#allocation5 + $0x608] sm:$0xff]
    %v247 = vld [vmem:[#allocation5 + $0x610] sm:$0xff]
    %v248 = vld [vmem:[#allocation5 + $0x618] sm:$0xff]
    %v249 = vld [vmem:[#allocation5 + $0x620] sm:$0xff]
    %v250 = vld [vmem:[#allocation5 + $0x628] sm:$0xff]
    %v251 = vld [vmem:[#allocation5 + $0x630] sm:$0xff]
    %v252 = vld [vmem:[#allocation5 + $0x638] sm:$0xff]
    %v253 = vld [vmem:[#allocation5 + $0x640] sm:$0xff]
    %v254 = vld [vmem:[#allocation5 + $0x648] sm:$0xff]
    %v255 = vld [vmem:[#allocation5 + $0x650] sm:$0xff]
    %v256 = vld [vmem:[#allocation5 + $0x658] sm:$0xff]
    %v257 = vld [vmem:[#allocation5 + $0x660] sm:$0xff]
    %v258 = vld [vmem:[#allocation5 + $0x668] sm:$0xff]
    %v259 = vld [vmem:[#allocation5 + $0x670] sm:$0xff]
    %v260 = vld [vmem:[#allocation5 + $0x678] sm:$0xff]
    %v261 = vld [vmem:[#allocation5 + $0x680] sm:$0xff]
    %v262 = vld [vmem:[#allocation5 + $0x688] sm:$0xff]
    %v263 = vld [vmem:[#allocation5 + $0x690] sm:$0xff]
    %v264 = vld [vmem:[#allocation5 + $0x698] sm:$0xff]
    %v265 = vld [vmem:[#allocation5 + $0x6a0] sm:$0xff]
    %v266 = vld [vmem:[#allocation5 + $0x6a8] sm:$0xff]
    %v267 = vld [vmem:[#allocation5 + $0x6b0] sm:$0xff]
    %v268 = vld [vmem:[#allocation5 + $0x6b8] sm:$0xff]
    %v269 = vld [vmem:[#allocation5 + $0x6c0] sm:$0xff]
    %v270 = vld [vmem:[#allocation5 + $0x6c8] sm:$0xff]
    %v271 = vld [vmem:[#allocation5 + $0x6d0] sm:$0xff]
    %v272 = vld [vmem:[#allocation5 + $0x6d8] sm:$0xff]
    %v273 = vld [vmem:[#allocation5 + $0x6e0] sm:$0xff]
    %v274 = vld [vmem:[#allocation5 + $0x6e8] sm:$0xff]
    %v275 = vld [vmem:[#allocation5 + $0x6f0] sm:$0xff]
    %v276 = vld [vmem:[#allocation5 + $0x6f8] sm:$0xff]
    %v277 = vld [vmem:[#allocation5 + $0x700] sm:$0xff]
    %v278 = vld [vmem:[#allocation5 + $0x708] sm:$0xff]
    %v279 = vld [vmem:[#allocation5 + $0x710] sm:$0xff]
    %v280 = vld [vmem:[#allocation5 + $0x718] sm:$0xff]
    %v281 = vld [vmem:[#allocation5 + $0x720] sm:$0xff]
    %v282 = vld [vmem:[#allocation5 + $0x728] sm:$0xff]
    %v283 = vld [vmem:[#allocation5 + $0x730] sm:$0xff]
    %v284 = vld [vmem:[#allocation5 + $0x738] sm:$0xff]
    %v285 = vld [vmem:[#allocation5 + $0x740] sm:$0xff]
    %v286 = vld [vmem:[#allocation5 + $0x748] sm:$0xff]
    %v287 = vld [vmem:[#allocation5 + $0x750] sm:$0xff]
    %v288 = vld [vmem:[#allocation5 + $0x758] sm:$0xff]
    %v289 = vld [vmem:[#allocation5 + $0x760] sm:$0xff]
    %v290 = vld [vmem:[#allocation5 + $0x768] sm:$0xff]
    %v291 = vld [vmem:[#allocation5 + $0x770] sm:$0xff]
    %v292 = vld [vmem:[#allocation5 + $0x778] sm:$0xff]
    %v293 = vld [vmem:[#allocation5 + $0x780] sm:$0xff]
    %v294 = vld [vmem:[#allocation5 + $0x788] sm:$0xff]
    %v295 = vld [vmem:[#allocation5 + $0x790] sm:$0xff]
    %v296 = vld [vmem:[#allocation5 + $0x798] sm:$0xff]
    %v297 = vld [vmem:[#allocation5 + $0x7a0] sm:$0xff]
    %v298 = vld [vmem:[#allocation5 + $0x7a8] sm:$0xff]
    %v299 = vld [vmem:[#allocation5 + $0x7b0] sm:$0xff]
    %v300 = vld [vmem:[#allocation5 + $0x7b8] sm:$0xff]
    %v301 = vld [vmem:[#allocation5 + $0x7c0] sm:$0xff]
    %v302 = vld [vmem:[#allocation5 + $0x7c8] sm:$0xff]
    %v303 = vld [vmem:[#allocation5 + $0x7d0] sm:$0xff]
    %v304 = vld [vmem:[#allocation5 + $0x7d8] sm:$0xff]
    %v305 = vld [vmem:[#allocation5 + $0x7e0] sm:$0xff]
    %v306 = vld [vmem:[#allocation5 + $0x7e8] sm:$0xff]
    %v307 = vld [vmem:[#allocation5 + $0x7f0] sm:$0xff]
    %v308 = vld [vmem:[#allocation5 + $0x7f8] sm:$0xff]
    %v309 = vld [vmem:[#allocation7] sm:$0xf]
    %v310 = vunpack.c.l.bf16 %v309
    %v312 = vcombine.high %v52, %v52
    %v314 = vunpack.c.l.s4 1966171168
    %v315 = vunpack.c.0.s8 %v314
    %v316 = vlaneseq
    %v317 = vshrl.u32 %v316, 7
    %v318 = vsub.s32 %v315, %v317
    %v319 = vrot.slane %v52, %v318
    %v321 = vunpack.c.l.s4 1966171168
    %v322 = vunpack.c.0.s8 %v321
    %v323 = vlaneseq
    %v324 = vshrl.u32 %v323, 7
    %v325 = vsub.s32 %v322, %v324
    %v326 = vrot.slane %v312, %v325
    %v327 = vcombine.high %v319, %v319
    %v328 = vcombine.high %v326, %v326
    %v330 = vunpack.c.l.s4 1966171168
    %v331 = vunpack.c.0.s8 %v330
    %v332 = vlaneseq
    %v333 = vshrl.u32 %v332, 7
    %v334 = vsub.s32 %v331, %v333
    %v335 = vrot.slane %v319, %v334
    %v337 = vunpack.c.l.s4 1966171168
    %v338 = vunpack.c.0.s8 %v337
    %v339 = vlaneseq
    %v340 = vshrl.u32 %v339, 7
    %v341 = vsub.s32 %v338, %v340
    %v342 = vrot.slane %v326, %v341
    %v344 = vunpack.c.l.s4 1966171168
    %v345 = vunpack.c.0.s8 %v344
    %v346 = vlaneseq
    %v347 = vshrl.u32 %v346, 7
    %v348 = vsub.s32 %v345, %v347
    %v349 = vrot.slane %v327, %v348
    %v351 = vunpack.c.l.s4 1966171168
    %v352 = vunpack.c.0.s8 %v351
    %v353 = vlaneseq
    %v354 = vshrl.u32 %v353, 7
    %v355 = vsub.s32 %v352, %v354
    %v356 = vrot.slane %v328, %v355
    %v357 = vcombine.high %v335, %v335
    %v358 = vcombine.high %v342, %v342
    %v359 = vcombine.high %v349, %v349
    %v360 = vcombine.high %v356, %v356
    %v625 = vunpack.c.l.b16 %v53
    %v626 = vunpack.c.h.b16 %v53
    %v627 = vunpack.c.l.b16 %v54
    %v628 = vunpack.c.h.b16 %v54
    %v629 = vunpack.c.l.b16 %v55
    %v630 = vunpack.c.h.b16 %v55
    %v631 = vunpack.c.l.b16 %v56
    %v632 = vunpack.c.h.b16 %v56
    %v633 = vunpack.c.l.b16 %v57
    %v634 = vunpack.c.h.b16 %v57
    %v635 = vunpack.c.l.b16 %v58
    %v636 = vunpack.c.h.b16 %v58
    %v637 = vunpack.c.l.b16 %v59
    %v638 = vunpack.c.h.b16 %v59
    %v639 = vunpack.c.l.b16 %v60
    %v640 = vunpack.c.h.b16 %v60
    %v641 = vunpack.c.l.b16 %v61
    %v642 = vunpack.c.h.b16 %v61
    %v643 = vunpack.c.l.b16 %v62
    %v644 = vunpack.c.h.b16 %v62
    %v645 = vunpack.c.l.b16 %v63
    %v646 = vunpack.c.h.b16 %v63
    %v647 = vunpack.c.l.b16 %v64
    %v648 = vunpack.c.h.b16 %v64
    %v649 = vunpack.c.l.b16 %v65
    %v650 = vunpack.c.h.b16 %v65
    %v651 = vunpack.c.l.b16 %v66
    %v652 = vunpack.c.h.b16 %v66
    %v653 = vunpack.c.l.b16 %v67
    %v654 = vunpack.c.h.b16 %v67
    %v655 = vunpack.c.l.b16 %v68
    %v656 = vunpack.c.h.b16 %v68
    %v657 = vunpack.c.l.b16 %v69
    %v658 = vunpack.c.h.b16 %v69
    %v659 = vunpack.c.l.b16 %v70
    %v660 = vunpack.c.h.b16 %v70
    %v661 = vunpack.c.l.b16 %v71
    %v662 = vunpack.c.h.b16 %v71
    %v663 = vunpack.c.l.b16 %v72
    %v664 = vunpack.c.h.b16 %v72
    %v665 = vunpack.c.l.b16 %v73
    %v666 = vunpack.c.h.b16 %v73
    %v667 = vunpack.c.l.b16 %v74
    %v668 = vunpack.c.h.b16 %v74
    %v669 = vunpack.c.l.b16 %v75
    %v670 = vunpack.c.h.b16 %v75
    %v671 = vunpack.c.l.b16 %v76
    %v672 = vunpack.c.h.b16 %v76
    %v673 = vunpack.c.l.b16 %v77
    %v674 = vunpack.c.h.b16 %v77
    %v675 = vunpack.c.l.b16 %v78
    %v676 = vunpack.c.h.b16 %v78
    %v677 = vunpack.c.l.b16 %v79
    %v678 = vunpack.c.h.b16 %v79
    %v679 = vunpack.c.l.b16 %v80
    %v680 = vunpack.c.h.b16 %v80
    %v681 = vunpack.c.l.b16 %v81
    %v682 = vunpack.c.h.b16 %v81
    %v683 = vunpack.c.l.b16 %v82
    %v684 = vunpack.c.h.b16 %v82
    %v685 = vunpack.c.l.b16 %v83
    %v686 = vunpack.c.h.b16 %v83
    %v687 = vunpack.c.l.b16 %v84
    %v688 = vunpack.c.h.b16 %v84
    %v689 = vunpack.c.l.b16 %v85
    %v690 = vunpack.c.h.b16 %v85
    %v691 = vunpack.c.l.b16 %v86
    %v692 = vunpack.c.h.b16 %v86
    %v693 = vunpack.c.l.b16 %v87
    %v694 = vunpack.c.h.b16 %v87
    %v695 = vunpack.c.l.b16 %v88
    %v696 = vunpack.c.h.b16 %v88
    %v697 = vunpack.c.l.b16 %v89
    %v698 = vunpack.c.h.b16 %v89
    %v699 = vunpack.c.l.b16 %v90
    %v700 = vunpack.c.h.b16 %v90
    %v701 = vunpack.c.l.b16 %v91
    %v702 = vunpack.c.h.b16 %v91
    %v703 = vunpack.c.l.b16 %v92
    %v704 = vunpack.c.h.b16 %v92
    %v705 = vunpack.c.l.b16 %v93
    %v706 = vunpack.c.h.b16 %v93
    %v707 = vunpack.c.l.b16 %v94
    %v708 = vunpack.c.h.b16 %v94
    %v709 = vunpack.c.l.b16 %v95
    %v710 = vunpack.c.h.b16 %v95
    %v711 = vunpack.c.l.b16 %v96
    %v712 = vunpack.c.h.b16 %v96
    %v713 = vunpack.c.l.b16 %v97
    %v714 = vunpack.c.h.b16 %v97
    %v715 = vunpack.c.l.b16 %v98
    %v716 = vunpack.c.h.b16 %v98
    %v717 = vunpack.c.l.b16 %v99
    %v718 = vunpack.c.h.b16 %v99
    %v719 = vunpack.c.l.b16 %v100
    %v720 = vunpack.c.h.b16 %v100
    %v721 = vunpack.c.l.b16 %v101
    %v722 = vunpack.c.h.b16 %v101
    %v723 = vunpack.c.l.b16 %v102
    %v724 = vunpack.c.h.b16 %v102
    %v725 = vunpack.c.l.b16 %v103
    %v726 = vunpack.c.h.b16 %v103
    %v727 = vunpack.c.l.b16 %v104
    %v728 = vunpack.c.h.b16 %v104
    %v729 = vunpack.c.l.b16 %v105
    %v730 = vunpack.c.h.b16 %v105
    %v731 = vunpack.c.l.b16 %v106
    %v732 = vunpack.c.h.b16 %v106
    %v733 = vunpack.c.l.b16 %v107
    %v734 = vunpack.c.h.b16 %v107
    %v735 = vunpack.c.l.b16 %v108
    %v736 = vunpack.c.h.b16 %v108
    %v737 = vunpack.c.l.b16 %v109
    %v738 = vunpack.c.h.b16 %v109
    %v739 = vunpack.c.l.b16 %v110
    %v740 = vunpack.c.h.b16 %v110
    %v741 = vunpack.c.l.b16 %v111
    %v742 = vunpack.c.h.b16 %v111
    %v743 = vunpack.c.l.b16 %v112
    %v744 = vunpack.c.h.b16 %v112
    %v745 = vunpack.c.l.b16 %v113
    %v746 = vunpack.c.h.b16 %v113
    %v747 = vunpack.c.l.b16 %v114
    %v748 = vunpack.c.h.b16 %v114
    %v749 = vunpack.c.l.b16 %v115
    %v750 = vunpack.c.h.b16 %v115
    %v751 = vunpack.c.l.b16 %v116
    %v752 = vunpack.c.h.b16 %v116
    %v753 = vunpack.c.l.b16 %v117
    %v754 = vunpack.c.h.b16 %v117
    %v755 = vunpack.c.l.b16 %v118
    %v756 = vunpack.c.h.b16 %v118
    %v757 = vunpack.c.l.b16 %v119
    %v758 = vunpack.c.h.b16 %v119
    %v759 = vunpack.c.l.b16 %v120
    %v760 = vunpack.c.h.b16 %v120
    %v761 = vunpack.c.l.b16 %v121
    %v762 = vunpack.c.h.b16 %v121
    %v763 = vunpack.c.l.b16 %v122
    %v764 = vunpack.c.h.b16 %v122
    %v765 = vunpack.c.l.b16 %v123
    %v766 = vunpack.c.h.b16 %v123
    %v767 = vunpack.c.l.b16 %v124
    %v768 = vunpack.c.h.b16 %v124
    %v769 = vunpack.c.l.b16 %v125
    %v770 = vunpack.c.h.b16 %v125
    %v771 = vunpack.c.l.b16 %v126
    %v772 = vunpack.c.h.b16 %v126
    %v773 = vunpack.c.l.b16 %v127
    %v774 = vunpack.c.h.b16 %v127
    %v775 = vunpack.c.l.b16 %v128
    %v776 = vunpack.c.h.b16 %v128
    %v777 = vunpack.c.l.b16 %v129
    %v778 = vunpack.c.h.b16 %v129
    %v779 = vunpack.c.l.b16 %v130
    %v780 = vunpack.c.h.b16 %v130
    %v781 = vunpack.c.l.b16 %v131
    %v782 = vunpack.c.h.b16 %v131
    %v783 = vunpack.c.l.b16 %v132
    %v784 = vunpack.c.h.b16 %v132
    %v785 = vunpack.c.l.b16 %v133
    %v786 = vunpack.c.h.b16 %v133
    %v787 = vunpack.c.l.b16 %v134
    %v788 = vunpack.c.h.b16 %v134
    %v789 = vunpack.c.l.b16 %v135
    %v790 = vunpack.c.h.b16 %v135
    %v791 = vunpack.c.l.b16 %v136
    %v792 = vunpack.c.h.b16 %v136
    %v793 = vunpack.c.l.b16 %v137
    %v794 = vunpack.c.h.b16 %v137
    %v795 = vunpack.c.l.b16 %v138
    %v796 = vunpack.c.h.b16 %v138
    %v797 = vunpack.c.l.b16 %v139
    %v798 = vunpack.c.h.b16 %v139
    %v799 = vunpack.c.l.b16 %v140
    %v800 = vunpack.c.h.b16 %v140
    %v801 = vunpack.c.l.b16 %v141
    %v802 = vunpack.c.h.b16 %v141
    %v803 = vunpack.c.l.b16 %v142
    %v804 = vunpack.c.h.b16 %v142
    %v805 = vunpack.c.l.b16 %v143
    %v806 = vunpack.c.h.b16 %v143
    %v807 = vunpack.c.l.b16 %v144
    %v808 = vunpack.c.h.b16 %v144
    %v809 = vunpack.c.l.b16 %v145
    %v810 = vunpack.c.h.b16 %v145
    %v811 = vunpack.c.l.b16 %v146
    %v812 = vunpack.c.h.b16 %v146
    %v813 = vunpack.c.l.b16 %v147
    %v814 = vunpack.c.h.b16 %v147
    %v815 = vunpack.c.l.b16 %v148
    %v816 = vunpack.c.h.b16 %v148
    %v817 = vunpack.c.l.b16 %v149
    %v818 = vunpack.c.h.b16 %v149
    %v819 = vunpack.c.l.b16 %v150
    %v820 = vunpack.c.h.b16 %v150
    %v821 = vunpack.c.l.b16 %v151
    %v822 = vunpack.c.h.b16 %v151
    %v823 = vunpack.c.l.b16 %v152
    %v824 = vunpack.c.h.b16 %v152
    %v825 = vunpack.c.l.b16 %v153
    %v826 = vunpack.c.h.b16 %v153
    %v827 = vunpack.c.l.b16 %v154
    %v828 = vunpack.c.h.b16 %v154
    %v829 = vunpack.c.l.b16 %v155
    %v830 = vunpack.c.h.b16 %v155
    %v831 = vunpack.c.l.b16 %v156
    %v832 = vunpack.c.h.b16 %v156
    %v833 = vunpack.c.l.b16 %v157
    %v834 = vunpack.c.h.b16 %v157
    %v835 = vunpack.c.l.b16 %v158
    %v836 = vunpack.c.h.b16 %v158
    %v837 = vunpack.c.l.b16 %v159
    %v838 = vunpack.c.h.b16 %v159
    %v839 = vunpack.c.l.b16 %v160
    %v840 = vunpack.c.h.b16 %v160
    %v841 = vunpack.c.l.b16 %v161
    %v842 = vunpack.c.h.b16 %v161
    %v843 = vunpack.c.l.b16 %v162
    %v844 = vunpack.c.h.b16 %v162
    %v845 = vunpack.c.l.b16 %v163
    %v846 = vunpack.c.h.b16 %v163
    %v847 = vunpack.c.l.b16 %v164
    %v848 = vunpack.c.h.b16 %v164
    %v849 = vunpack.c.l.b16 %v165
    %v850 = vunpack.c.h.b16 %v165
    %v851 = vunpack.c.l.b16 %v166
    %v852 = vunpack.c.h.b16 %v166
    %v853 = vunpack.c.l.b16 %v167
    %v854 = vunpack.c.h.b16 %v167
    %v855 = vunpack.c.l.b16 %v168
    %v856 = vunpack.c.h.b16 %v168
    %v857 = vunpack.c.l.b16 %v169
    %v858 = vunpack.c.h.b16 %v169
    %v859 = vunpack.c.l.b16 %v170
    %v860 = vunpack.c.h.b16 %v170
    %v861 = vunpack.c.l.b16 %v171
    %v862 = vunpack.c.h.b16 %v171
    %v863 = vunpack.c.l.b16 %v172
    %v864 = vunpack.c.h.b16 %v172
    %v865 = vunpack.c.l.b16 %v173
    %v866 = vunpack.c.h.b16 %v173
    %v867 = vunpack.c.l.b16 %v174
    %v868 = vunpack.c.h.b16 %v174
    %v869 = vunpack.c.l.b16 %v175
    %v870 = vunpack.c.h.b16 %v175
    %v871 = vunpack.c.l.b16 %v176
    %v872 = vunpack.c.h.b16 %v176
    %v873 = vunpack.c.l.b16 %v177
    %v874 = vunpack.c.h.b16 %v177
    %v875 = vunpack.c.l.b16 %v178
    %v876 = vunpack.c.h.b16 %v178
    %v877 = vunpack.c.l.b16 %v179
    %v878 = vunpack.c.h.b16 %v179
    %v879 = vunpack.c.l.b16 %v180
    %v880 = vunpack.c.h.b16 %v180
    %v881 = vunpack.c.l.b16 %v181
    %v882 = vunpack.c.h.b16 %v181
    %v883 = vunpack.c.l.b16 %v182
    %v884 = vunpack.c.h.b16 %v182
    %v885 = vunpack.c.l.b16 %v183
    %v886 = vunpack.c.h.b16 %v183
    %v887 = vunpack.c.l.b16 %v184
    %v888 = vunpack.c.h.b16 %v184
    %v889 = vunpack.c.l.b16 %v185
    %v890 = vunpack.c.h.b16 %v185
    %v891 = vunpack.c.l.b16 %v186
    %v892 = vunpack.c.h.b16 %v186
    %v893 = vunpack.c.l.b16 %v187
    %v894 = vunpack.c.h.b16 %v187
    %v895 = vunpack.c.l.b16 %v188
    %v896 = vunpack.c.h.b16 %v188
    %v897 = vunpack.c.l.b16 %v189
    %v898 = vunpack.c.h.b16 %v189
    %v899 = vunpack.c.l.b16 %v190
    %v900 = vunpack.c.h.b16 %v190
    %v901 = vunpack.c.l.b16 %v191
    %v902 = vunpack.c.h.b16 %v191
    %v903 = vunpack.c.l.b16 %v192
    %v904 = vunpack.c.h.b16 %v192
    %v905 = vunpack.c.l.b16 %v193
    %v906 = vunpack.c.h.b16 %v193
    %v907 = vunpack.c.l.b16 %v194
    %v908 = vunpack.c.h.b16 %v194
    %v909 = vunpack.c.l.b16 %v195
    %v910 = vunpack.c.h.b16 %v195
    %v911 = vunpack.c.l.b16 %v196
    %v912 = vunpack.c.h.b16 %v196
    %v913 = vunpack.c.l.b16 %v197
    %v914 = vunpack.c.h.b16 %v197
    %v915 = vunpack.c.l.b16 %v198
    %v916 = vunpack.c.h.b16 %v198
    %v917 = vunpack.c.l.b16 %v199
    %v918 = vunpack.c.h.b16 %v199
    %v919 = vunpack.c.l.b16 %v200
    %v920 = vunpack.c.h.b16 %v200
    %v921 = vunpack.c.l.b16 %v201
    %v922 = vunpack.c.h.b16 %v201
    %v923 = vunpack.c.l.b16 %v202
    %v924 = vunpack.c.h.b16 %v202
    %v925 = vunpack.c.l.b16 %v203
    %v926 = vunpack.c.h.b16 %v203
    %v927 = vunpack.c.l.b16 %v204
    %v928 = vunpack.c.h.b16 %v204
    %v929 = vunpack.c.l.b16 %v205
    %v930 = vunpack.c.h.b16 %v205
    %v931 = vunpack.c.l.b16 %v206
    %v932 = vunpack.c.h.b16 %v206
    %v933 = vunpack.c.l.b16 %v207
    %v934 = vunpack.c.h.b16 %v207
    %v935 = vunpack.c.l.b16 %v208
    %v936 = vunpack.c.h.b16 %v208
    %v937 = vunpack.c.l.b16 %v209
    %v938 = vunpack.c.h.b16 %v209
    %v939 = vunpack.c.l.b16 %v210
    %v940 = vunpack.c.h.b16 %v210
    %v941 = vunpack.c.l.b16 %v211
    %v942 = vunpack.c.h.b16 %v211
    %v943 = vunpack.c.l.b16 %v212
    %v944 = vunpack.c.h.b16 %v212
    %v945 = vunpack.c.l.b16 %v213
    %v946 = vunpack.c.h.b16 %v213
    %v947 = vunpack.c.l.b16 %v214
    %v948 = vunpack.c.h.b16 %v214
    %v949 = vunpack.c.l.b16 %v215
    %v950 = vunpack.c.h.b16 %v215
    %v951 = vunpack.c.l.b16 %v216
    %v952 = vunpack.c.h.b16 %v216
    %v953 = vunpack.c.l.b16 %v217
    %v954 = vunpack.c.h.b16 %v217
    %v955 = vunpack.c.l.b16 %v218
    %v956 = vunpack.c.h.b16 %v218
    %v957 = vunpack.c.l.b16 %v219
    %v958 = vunpack.c.h.b16 %v219
    %v959 = vunpack.c.l.b16 %v220
    %v960 = vunpack.c.h.b16 %v220
    %v961 = vunpack.c.l.b16 %v221
    %v962 = vunpack.c.h.b16 %v221
    %v963 = vunpack.c.l.b16 %v222
    %v964 = vunpack.c.h.b16 %v222
    %v965 = vunpack.c.l.b16 %v223
    %v966 = vunpack.c.h.b16 %v223
    %v967 = vunpack.c.l.b16 %v224
    %v968 = vunpack.c.h.b16 %v224
    %v969 = vunpack.c.l.b16 %v225
    %v970 = vunpack.c.h.b16 %v225
    %v971 = vunpack.c.l.b16 %v226
    %v972 = vunpack.c.h.b16 %v226
    %v973 = vunpack.c.l.b16 %v227
    %v974 = vunpack.c.h.b16 %v227
    %v975 = vunpack.c.l.b16 %v228
    %v976 = vunpack.c.h.b16 %v228
    %v977 = vunpack.c.l.b16 %v229
    %v978 = vunpack.c.h.b16 %v229
    %v979 = vunpack.c.l.b16 %v230
    %v980 = vunpack.c.h.b16 %v230
    %v981 = vunpack.c.l.b16 %v231
    %v982 = vunpack.c.h.b16 %v231
    %v983 = vunpack.c.l.b16 %v232
    %v984 = vunpack.c.h.b16 %v232
    %v985 = vunpack.c.l.b16 %v233
    %v986 = vunpack.c.h.b16 %v233
    %v987 = vunpack.c.l.b16 %v234
    %v988 = vunpack.c.h.b16 %v234
    %v989 = vunpack.c.l.b16 %v235
    %v990 = vunpack.c.h.b16 %v235
    %v991 = vunpack.c.l.b16 %v236
    %v992 = vunpack.c.h.b16 %v236
    %v993 = vunpack.c.l.b16 %v237
    %v994 = vunpack.c.h.b16 %v237
    %v995 = vunpack.c.l.b16 %v238
    %v996 = vunpack.c.h.b16 %v238
    %v997 = vunpack.c.l.b16 %v239
    %v998 = vunpack.c.h.b16 %v239
    %v999 = vunpack.c.l.b16 %v240
    %v1000 = vunpack.c.h.b16 %v240
    %v1001 = vunpack.c.l.b16 %v241
    %v1002 = vunpack.c.h.b16 %v241
    %v1003 = vunpack.c.l.b16 %v242
    %v1004 = vunpack.c.h.b16 %v242
    %v1005 = vunpack.c.l.b16 %v243
    %v1006 = vunpack.c.h.b16 %v243
    %v1007 = vunpack.c.l.b16 %v244
    %v1008 = vunpack.c.h.b16 %v244
    %v1009 = vunpack.c.l.b16 %v245
    %v1010 = vunpack.c.h.b16 %v245
    %v1011 = vunpack.c.l.b16 %v246
    %v1012 = vunpack.c.h.b16 %v246
    %v1013 = vunpack.c.l.b16 %v247
    %v1014 = vunpack.c.h.b16 %v247
    %v1015 = vunpack.c.l.b16 %v248
    %v1016 = vunpack.c.h.b16 %v248
    %v1017 = vunpack.c.l.b16 %v249
    %v1018 = vunpack.c.h.b16 %v249
    %v1019 = vunpack.c.l.b16 %v250
    %v1020 = vunpack.c.h.b16 %v250
    %v1021 = vunpack.c.l.b16 %v251
    %v1022 = vunpack.c.h.b16 %v251
    %v1023 = vunpack.c.l.b16 %v252
    %v1024 = vunpack.c.h.b16 %v252
    %v1025 = vunpack.c.l.b16 %v253
    %v1026 = vunpack.c.h.b16 %v253
    %v1027 = vunpack.c.l.b16 %v254
    %v1028 = vunpack.c.h.b16 %v254
    %v1029 = vunpack.c.l.b16 %v255
    %v1030 = vunpack.c.h.b16 %v255
    %v1031 = vunpack.c.l.b16 %v256
    %v1032 = vunpack.c.h.b16 %v256
    %v1033 = vunpack.c.l.b16 %v257
    %v1034 = vunpack.c.h.b16 %v257
    %v1035 = vunpack.c.l.b16 %v258
    %v1036 = vunpack.c.h.b16 %v258
    %v1037 = vunpack.c.l.b16 %v259
    %v1038 = vunpack.c.h.b16 %v259
    %v1039 = vunpack.c.l.b16 %v260
    %v1040 = vunpack.c.h.b16 %v260
    %v1041 = vunpack.c.l.b16 %v261
    %v1042 = vunpack.c.h.b16 %v261
    %v1043 = vunpack.c.l.b16 %v262
    %v1044 = vunpack.c.h.b16 %v262
    %v1045 = vunpack.c.l.b16 %v263
    %v1046 = vunpack.c.h.b16 %v263
    %v1047 = vunpack.c.l.b16 %v264
    %v1048 = vunpack.c.h.b16 %v264
    %v1049 = vunpack.c.l.b16 %v265
    %v1050 = vunpack.c.h.b16 %v265
    %v1051 = vunpack.c.l.b16 %v266
    %v1052 = vunpack.c.h.b16 %v266
    %v1053 = vunpack.c.l.b16 %v267
    %v1054 = vunpack.c.h.b16 %v267
    %v1055 = vunpack.c.l.b16 %v268
    %v1056 = vunpack.c.h.b16 %v268
    %v1057 = vunpack.c.l.b16 %v269
    %v1058 = vunpack.c.h.b16 %v269
    %v1059 = vunpack.c.l.b16 %v270
    %v1060 = vunpack.c.h.b16 %v270
    %v1061 = vunpack.c.l.b16 %v271
    %v1062 = vunpack.c.h.b16 %v271
    %v1063 = vunpack.c.l.b16 %v272
    %v1064 = vunpack.c.h.b16 %v272
    %v1065 = vunpack.c.l.b16 %v273
    %v1066 = vunpack.c.h.b16 %v273
    %v1067 = vunpack.c.l.b16 %v274
    %v1068 = vunpack.c.h.b16 %v274
    %v1069 = vunpack.c.l.b16 %v275
    %v1070 = vunpack.c.h.b16 %v275
    %v1071 = vunpack.c.l.b16 %v276
    %v1072 = vunpack.c.h.b16 %v276
    %v1073 = vunpack.c.l.b16 %v277
    %v1074 = vunpack.c.h.b16 %v277
    %v1075 = vunpack.c.l.b16 %v278
    %v1076 = vunpack.c.h.b16 %v278
    %v1077 = vunpack.c.l.b16 %v279
    %v1078 = vunpack.c.h.b16 %v279
    %v1079 = vunpack.c.l.b16 %v280
    %v1080 = vunpack.c.h.b16 %v280
    %v1081 = vunpack.c.l.b16 %v281
    %v1082 = vunpack.c.h.b16 %v281
    %v1083 = vunpack.c.l.b16 %v282
    %v1084 = vunpack.c.h.b16 %v282
    %v1085 = vunpack.c.l.b16 %v283
    %v1086 = vunpack.c.h.b16 %v283
    %v1087 = vunpack.c.l.b16 %v284
    %v1088 = vunpack.c.h.b16 %v284
    %v1089 = vunpack.c.l.b16 %v285
    %v1090 = vunpack.c.h.b16 %v285
    %v1091 = vunpack.c.l.b16 %v286
    %v1092 = vunpack.c.h.b16 %v286
    %v1093 = vunpack.c.l.b16 %v287
    %v1094 = vunpack.c.h.b16 %v287
    %v1095 = vunpack.c.l.b16 %v288
    %v1096 = vunpack.c.h.b16 %v288
    %v1097 = vunpack.c.l.b16 %v289
    %v1098 = vunpack.c.h.b16 %v289
    %v1099 = vunpack.c.l.b16 %v290
    %v1100 = vunpack.c.h.b16 %v290
    %v1101 = vunpack.c.l.b16 %v291
    %v1102 = vunpack.c.h.b16 %v291
    %v1103 = vunpack.c.l.b16 %v292
    %v1104 = vunpack.c.h.b16 %v292
    %v1105 = vunpack.c.l.b16 %v293
    %v1106 = vunpack.c.h.b16 %v293
    %v1107 = vunpack.c.l.b16 %v294
    %v1108 = vunpack.c.h.b16 %v294
    %v1109 = vunpack.c.l.b16 %v295
    %v1110 = vunpack.c.h.b16 %v295
    %v1111 = vunpack.c.l.b16 %v296
    %v1112 = vunpack.c.h.b16 %v296
    %v1113 = vunpack.c.l.b16 %v297
    %v1114 = vunpack.c.h.b16 %v297
    %v1115 = vunpack.c.l.b16 %v298
    %v1116 = vunpack.c.h.b16 %v298
    %v1117 = vunpack.c.l.b16 %v299
    %v1118 = vunpack.c.h.b16 %v299
    %v1119 = vunpack.c.l.b16 %v300
    %v1120 = vunpack.c.h.b16 %v300
    %v1121 = vunpack.c.l.b16 %v301
    %v1122 = vunpack.c.h.b16 %v301
    %v1123 = vunpack.c.l.b16 %v302
    %v1124 = vunpack.c.h.b16 %v302
    %v1125 = vunpack.c.l.b16 %v303
    %v1126 = vunpack.c.h.b16 %v303
    %v1127 = vunpack.c.l.b16 %v304
    %v1128 = vunpack.c.h.b16 %v304
    %v1129 = vunpack.c.l.b16 %v305
    %v1130 = vunpack.c.h.b16 %v305
    %v1131 = vunpack.c.l.b16 %v306
    %v1132 = vunpack.c.h.b16 %v306
    %v1133 = vunpack.c.l.b16 %v307
    %v1134 = vunpack.c.h.b16 %v307
    %v1135 = vunpack.c.l.b16 %v308
    %v1136 = vunpack.c.h.b16 %v308
    %v1137 = vpack.c.b16 %v629, %v625
    %v1138 = vpack.c.b16 %v630, %v626
    %v1139 = vpack.c.b16 %v631, %v627
    %v1140 = vpack.c.b16 %v632, %v628
    %v1141 = vpack.c.b16 %v637, %v633
    %v1142 = vpack.c.b16 %v638, %v634
    %v1143 = vpack.c.b16 %v639, %v635
    %v1144 = vpack.c.b16 %v640, %v636
    %v1145 = vpack.c.b16 %v645, %v641
    %v1146 = vpack.c.b16 %v646, %v642
    %v1147 = vpack.c.b16 %v647, %v643
    %v1148 = vpack.c.b16 %v648, %v644
    %v1149 = vpack.c.b16 %v653, %v649
    %v1150 = vpack.c.b16 %v654, %v650
    %v1151 = vpack.c.b16 %v655, %v651
    %v1152 = vpack.c.b16 %v656, %v652
    %v1153 = vpack.c.b16 %v661, %v657
    %v1154 = vpack.c.b16 %v662, %v658
    %v1155 = vpack.c.b16 %v663, %v659
    %v1156 = vpack.c.b16 %v664, %v660
    %v1157 = vpack.c.b16 %v669, %v665
    %v1158 = vpack.c.b16 %v670, %v666
    %v1159 = vpack.c.b16 %v671, %v667
    %v1160 = vpack.c.b16 %v672, %v668
    %v1161 = vpack.c.b16 %v677, %v673
    %v1162 = vpack.c.b16 %v678, %v674
    %v1163 = vpack.c.b16 %v679, %v675
    %v1164 = vpack.c.b16 %v680, %v676
    %v1165 = vpack.c.b16 %v685, %v681
    %v1166 = vpack.c.b16 %v686, %v682
    %v1167 = vpack.c.b16 %v687, %v683
    %v1168 = vpack.c.b16 %v688, %v684
    %v1169 = vpack.c.b16 %v693, %v689
    %v1170 = vpack.c.b16 %v694, %v690
    %v1171 = vpack.c.b16 %v695, %v691
    %v1172 = vpack.c.b16 %v696, %v692
    %v1173 = vpack.c.b16 %v701, %v697
    %v1174 = vpack.c.b16 %v702, %v698
    %v1175 = vpack.c.b16 %v703, %v699
    %v1176 = vpack.c.b16 %v704, %v700
    %v1177 = vpack.c.b16 %v709, %v705
    %v1178 = vpack.c.b16 %v710, %v706
    %v1179 = vpack.c.b16 %v711, %v707
    %v1180 = vpack.c.b16 %v712, %v708
    %v1181 = vpack.c.b16 %v717, %v713
    %v1182 = vpack.c.b16 %v718, %v714
    %v1183 = vpack.c.b16 %v719, %v715
    %v1184 = vpack.c.b16 %v720, %v716
    %v1185 = vpack.c.b16 %v725, %v721
    %v1186 = vpack.c.b16 %v726, %v722
    %v1187 = vpack.c.b16 %v727, %v723
    %v1188 = vpack.c.b16 %v728, %v724
    %v1189 = vpack.c.b16 %v733, %v729
    %v1190 = vpack.c.b16 %v734, %v730
    %v1191 = vpack.c.b16 %v735, %v731
    %v1192 = vpack.c.b16 %v736, %v732
    %v1193 = vpack.c.b16 %v741, %v737
    %v1194 = vpack.c.b16 %v742, %v738
    %v1195 = vpack.c.b16 %v743, %v739
    %v1196 = vpack.c.b16 %v744, %v740
    %v1197 = vpack.c.b16 %v749, %v745
    %v1198 = vpack.c.b16 %v750, %v746
    %v1199 = vpack.c.b16 %v751, %v747
    %v1200 = vpack.c.b16 %v752, %v748
    %v1201 = vpack.c.b16 %v757, %v753
    %v1202 = vpack.c.b16 %v758, %v754
    %v1203 = vpack.c.b16 %v759, %v755
    %v1204 = vpack.c.b16 %v760, %v756
    %v1205 = vpack.c.b16 %v765, %v761
    %v1206 = vpack.c.b16 %v766, %v762
    %v1207 = vpack.c.b16 %v767, %v763
    %v1208 = vpack.c.b16 %v768, %v764
    %v1209 = vpack.c.b16 %v773, %v769
    %v1210 = vpack.c.b16 %v774, %v770
    %v1211 = vpack.c.b16 %v775, %v771
    %v1212 = vpack.c.b16 %v776, %v772
    %v1213 = vpack.c.b16 %v781, %v777
    %v1214 = vpack.c.b16 %v782, %v778
    %v1215 = vpack.c.b16 %v783, %v779
    %v1216 = vpack.c.b16 %v784, %v780
    %v1217 = vpack.c.b16 %v789, %v785
    %v1218 = vpack.c.b16 %v790, %v786
    %v1219 = vpack.c.b16 %v791, %v787
    %v1220 = vpack.c.b16 %v792, %v788
    %v1221 = vpack.c.b16 %v797, %v793
    %v1222 = vpack.c.b16 %v798, %v794
    %v1223 = vpack.c.b16 %v799, %v795
    %v1224 = vpack.c.b16 %v800, %v796
    %v1225 = vpack.c.b16 %v805, %v801
    %v1226 = vpack.c.b16 %v806, %v802
    %v1227 = vpack.c.b16 %v807, %v803
    %v1228 = vpack.c.b16 %v808, %v804
    %v1229 = vpack.c.b16 %v813, %v809
    %v1230 = vpack.c.b16 %v814, %v810
    %v1231 = vpack.c.b16 %v815, %v811
    %v1232 = vpack.c.b16 %v816, %v812
    %v1233 = vpack.c.b16 %v821, %v817
    %v1234 = vpack.c.b16 %v822, %v818
    %v1235 = vpack.c.b16 %v823, %v819
    %v1236 = vpack.c.b16 %v824, %v820
    %v1237 = vpack.c.b16 %v829, %v825
    %v1238 = vpack.c.b16 %v830, %v826
    %v1239 = vpack.c.b16 %v831, %v827
    %v1240 = vpack.c.b16 %v832, %v828
    %v1241 = vpack.c.b16 %v837, %v833
    %v1242 = vpack.c.b16 %v838, %v834
    %v1243 = vpack.c.b16 %v839, %v835
    %v1244 = vpack.c.b16 %v840, %v836
    %v1245 = vpack.c.b16 %v845, %v841
    %v1246 = vpack.c.b16 %v846, %v842
    %v1247 = vpack.c.b16 %v847, %v843
    %v1248 = vpack.c.b16 %v848, %v844
    %v1249 = vpack.c.b16 %v853, %v849
    %v1250 = vpack.c.b16 %v854, %v850
    %v1251 = vpack.c.b16 %v855, %v851
    %v1252 = vpack.c.b16 %v856, %v852
    %v1253 = vpack.c.b16 %v861, %v857
    %v1254 = vpack.c.b16 %v862, %v858
    %v1255 = vpack.c.b16 %v863, %v859
    %v1256 = vpack.c.b16 %v864, %v860
    %v1257 = vpack.c.b16 %v869, %v865
    %v1258 = vpack.c.b16 %v870, %v866
    %v1259 = vpack.c.b16 %v871, %v867
    %v1260 = vpack.c.b16 %v872, %v868
    %v1261 = vpack.c.b16 %v877, %v873
    %v1262 = vpack.c.b16 %v878, %v874
    %v1263 = vpack.c.b16 %v879, %v875
    %v1264 = vpack.c.b16 %v880, %v876
    %v1265 = vpack.c.b16 %v885, %v881
    %v1266 = vpack.c.b16 %v886, %v882
    %v1267 = vpack.c.b16 %v887, %v883
    %v1268 = vpack.c.b16 %v888, %v884
    %v1269 = vpack.c.b16 %v893, %v889
    %v1270 = vpack.c.b16 %v894, %v890
    %v1271 = vpack.c.b16 %v895, %v891
    %v1272 = vpack.c.b16 %v896, %v892
    %v1273 = vpack.c.b16 %v901, %v897
    %v1274 = vpack.c.b16 %v902, %v898
    %v1275 = vpack.c.b16 %v903, %v899
    %v1276 = vpack.c.b16 %v904, %v900
    %v1277 = vpack.c.b16 %v909, %v905
    %v1278 = vpack.c.b16 %v910, %v906
    %v1279 = vpack.c.b16 %v911, %v907
    %v1280 = vpack.c.b16 %v912, %v908
    %v1281 = vpack.c.b16 %v917, %v913
    %v1282 = vpack.c.b16 %v918, %v914
    %v1283 = vpack.c.b16 %v919, %v915
    %v1284 = vpack.c.b16 %v920, %v916
    %v1285 = vpack.c.b16 %v925, %v921
    %v1286 = vpack.c.b16 %v926, %v922
    %v1287 = vpack.c.b16 %v927, %v923
    %v1288 = vpack.c.b16 %v928, %v924
    %v1289 = vpack.c.b16 %v933, %v929
    %v1290 = vpack.c.b16 %v934, %v930
    %v1291 = vpack.c.b16 %v935, %v931
    %v1292 = vpack.c.b16 %v936, %v932
    %v1293 = vpack.c.b16 %v941, %v937
    %v1294 = vpack.c.b16 %v942, %v938
    %v1295 = vpack.c.b16 %v943, %v939
    %v1296 = vpack.c.b16 %v944, %v940
    %v1297 = vpack.c.b16 %v949, %v945
    %v1298 = vpack.c.b16 %v950, %v946
    %v1299 = vpack.c.b16 %v951, %v947
    %v1300 = vpack.c.b16 %v952, %v948
    %v1301 = vpack.c.b16 %v957, %v953
    %v1302 = vpack.c.b16 %v958, %v954
    %v1303 = vpack.c.b16 %v959, %v955
    %v1304 = vpack.c.b16 %v960, %v956
    %v1305 = vpack.c.b16 %v965, %v961
    %v1306 = vpack.c.b16 %v966, %v962
    %v1307 = vpack.c.b16 %v967, %v963
    %v1308 = vpack.c.b16 %v968, %v964
    %v1309 = vpack.c.b16 %v973, %v969
    %v1310 = vpack.c.b16 %v974, %v970
    %v1311 = vpack.c.b16 %v975, %v971
    %v1312 = vpack.c.b16 %v976, %v972
    %v1313 = vpack.c.b16 %v981, %v977
    %v1314 = vpack.c.b16 %v982, %v978
    %v1315 = vpack.c.b16 %v983, %v979
    %v1316 = vpack.c.b16 %v984, %v980
    %v1317 = vpack.c.b16 %v989, %v985
    %v1318 = vpack.c.b16 %v990, %v986
    %v1319 = vpack.c.b16 %v991, %v987
    %v1320 = vpack.c.b16 %v992, %v988
    %v1321 = vpack.c.b16 %v997, %v993
    %v1322 = vpack.c.b16 %v998, %v994
    %v1323 = vpack.c.b16 %v999, %v995
    %v1324 = vpack.c.b16 %v1000, %v996
    %v1325 = vpack.c.b16 %v1005, %v1001
    %v1326 = vpack.c.b16 %v1006, %v1002
    %v1327 = vpack.c.b16 %v1007, %v1003
    %v1328 = vpack.c.b16 %v1008, %v1004
    %v1329 = vpack.c.b16 %v1013, %v1009
    %v1330 = vpack.c.b16 %v1014, %v1010
    %v1331 = vpack.c.b16 %v1015, %v1011
    %v1332 = vpack.c.b16 %v1016, %v1012
    %v1333 = vpack.c.b16 %v1021, %v1017
    %v1334 = vpack.c.b16 %v1022, %v1018
    %v1335 = vpack.c.b16 %v1023, %v1019
    %v1336 = vpack.c.b16 %v1024, %v1020
    %v1337 = vpack.c.b16 %v1029, %v1025
    %v1338 = vpack.c.b16 %v1030, %v1026
    %v1339 = vpack.c.b16 %v1031, %v1027
    %v1340 = vpack.c.b16 %v1032, %v1028
    %v1341 = vpack.c.b16 %v1037, %v1033
    %v1342 = vpack.c.b16 %v1038, %v1034
    %v1343 = vpack.c.b16 %v1039, %v1035
    %v1344 = vpack.c.b16 %v1040, %v1036
    %v1345 = vpack.c.b16 %v1045, %v1041
    %v1346 = vpack.c.b16 %v1046, %v1042
    %v1347 = vpack.c.b16 %v1047, %v1043
    %v1348 = vpack.c.b16 %v1048, %v1044
    %v1349 = vpack.c.b16 %v1053, %v1049
    %v1350 = vpack.c.b16 %v1054, %v1050
    %v1351 = vpack.c.b16 %v1055, %v1051
    %v1352 = vpack.c.b16 %v1056, %v1052
    %v1353 = vpack.c.b16 %v1061, %v1057
    %v1354 = vpack.c.b16 %v1062, %v1058
    %v1355 = vpack.c.b16 %v1063, %v1059
    %v1356 = vpack.c.b16 %v1064, %v1060
    %v1357 = vpack.c.b16 %v1069, %v1065
    %v1358 = vpack.c.b16 %v1070, %v1066
    %v1359 = vpack.c.b16 %v1071, %v1067
    %v1360 = vpack.c.b16 %v1072, %v1068
    %v1361 = vpack.c.b16 %v1077, %v1073
    %v1362 = vpack.c.b16 %v1078, %v1074
    %v1363 = vpack.c.b16 %v1079, %v1075
    %v1364 = vpack.c.b16 %v1080, %v1076
    %v1365 = vpack.c.b16 %v1085, %v1081
    %v1366 = vpack.c.b16 %v1086, %v1082
    %v1367 = vpack.c.b16 %v1087, %v1083
    %v1368 = vpack.c.b16 %v1088, %v1084
    %v1369 = vpack.c.b16 %v1093, %v1089
    %v1370 = vpack.c.b16 %v1094, %v1090
    %v1371 = vpack.c.b16 %v1095, %v1091
    %v1372 = vpack.c.b16 %v1096, %v1092
    %v1373 = vpack.c.b16 %v1101, %v1097
    %v1374 = vpack.c.b16 %v1102, %v1098
    %v1375 = vpack.c.b16 %v1103, %v1099
    %v1376 = vpack.c.b16 %v1104, %v1100
    %v1377 = vpack.c.b16 %v1109, %v1105
    %v1378 = vpack.c.b16 %v1110, %v1106
    %v1379 = vpack.c.b16 %v1111, %v1107
    %v1380 = vpack.c.b16 %v1112, %v1108
    %v1381 = vpack.c.b16 %v1117, %v1113
    %v1382 = vpack.c.b16 %v1118, %v1114
    %v1383 = vpack.c.b16 %v1119, %v1115
    %v1384 = vpack.c.b16 %v1120, %v1116
    %v1385 = vpack.c.b16 %v1125, %v1121
    %v1386 = vpack.c.b16 %v1126, %v1122
    %v1387 = vpack.c.b16 %v1127, %v1123
    %v1388 = vpack.c.b16 %v1128, %v1124
    %v1389 = vpack.c.b16 %v1133, %v1129
    %v1390 = vpack.c.b16 %v1134, %v1130
    %v1391 = vpack.c.b16 %v1135, %v1131
    %v1392 = vpack.c.b16 %v1136, %v1132
    %v1650 = vcombine.high %v310, %v310
    %v1652 = vunpack.c.l.s4 1983009808
    %v1653 = vunpack.c.0.s8 %v1652
    %v1654 = vlaneseq
    %v1655 = vshrl.u32 %v1654, 7
    %v1656 = vsub.s32 %v1653, %v1655
    %v1657 = vrot.slane %v310, %v1656
    %v1659 = vunpack.c.l.s4 1983009808
    %v1660 = vunpack.c.0.s8 %v1659
    %v1661 = vlaneseq
    %v1662 = vshrl.u32 %v1661, 7
    %v1663 = vsub.s32 %v1660, %v1662
    %v1664 = vrot.slane %v1650, %v1663
    %v1665 = vcombine.high %v1657, %v1657
    %v1666 = vcombine.high %v1664, %v1664
    %1671 = vmatprep.subr.bf16.mxu0 %v1166
    %1672 = vmatpush1.bf16.msra.mxu0 %v1165
    %1673 = vmatprep.subr.bf16.mxu0 %v1162
    %1674 = vmatpush1.bf16.msra.mxu0 %v1161
    %1675 = vmatprep.subr.bf16.mxu0 %v1158
    %1676 = vmatpush1.bf16.msra.mxu0 %v1157
    %1677 = vmatprep.subr.bf16.mxu0 %v1154
    %1678 = vmatpush1.bf16.msra.mxu0 %v1153
    %1679 = vmatprep.subr.bf16.mxu0 %v1150
    %1680 = vmatpush1.bf16.msra.mxu0 %v1149
    %1681 = vmatprep.subr.bf16.mxu0 %v1146
    %1682 = vmatpush1.bf16.msra.mxu0 %v1145
    %1683 = vmatprep.subr.bf16.mxu0 %v1142
    %1684 = vmatpush1.bf16.msra.mxu0 %v1141
    %1685 = vmatprep.subr.bf16.mxu0 %v1138
    %1686 = vmatpush1.bf16.msra.mxu0 %v1137
    %1687 = vmatprep.subr.bf16.mxu0 %v1198
    %1688 = vmatpush2.bf16.msra.mxu0 %v1197
    %1689 = vmatprep.subr.bf16.mxu0 %v1194
    %1690 = vmatpush2.bf16.msra.mxu0 %v1193
    %1691 = vmatprep.subr.bf16.mxu0 %v1190
    %1692 = vmatpush2.bf16.msra.mxu0 %v1189
    %1693 = vmatprep.subr.bf16.mxu0 %v1186
    %1694 = vmatpush2.bf16.msra.mxu0 %v1185
    %1695 = vmatprep.subr.bf16.mxu0 %v1182
    %1696 = vmatpush2.bf16.msra.mxu0 %v1181
    %1697 = vmatprep.subr.bf16.mxu0 %v1178
    %1698 = vmatpush2.bf16.msra.mxu0 %v1177
    %1699 = vmatprep.subr.bf16.mxu0 %v1174
    %1700 = vmatpush2.bf16.msra.mxu0 %v1173
    %1701 = vmatprep.subr.bf16.mxu0 %v1170
    %1702 = vmatpush2.bf16.msra.mxu0 %v1169
    %1703 = vmatprep.mubr.bf16.mxu0 %v349
    %1704 = vmatmul.mubr.bf16.gmra.mxu0 %v335
    %v1705 = vpop.f32.mrf.mxu0
    %v1706 = vadd.f32 %v1657, %v1705
    %v1707 = vpop.f32.mrf.mxu0
    %v1708 = vadd.f32 %v1665, %v1707
    %v1709 = vpop.f32.mrf.mxu0
    %v1710 = vpop.f32.mrf.mxu0
    %1711 = vdwg.mxu0
    %1712 = vmatprep.subr.bf16.mxu0 %v1230
    %1713 = vmatpush1.bf16.msra.mxu0 %v1229
    %1714 = vmatprep.subr.bf16.mxu0 %v1226
    %1715 = vmatpush1.bf16.msra.mxu0 %v1225
    %1716 = vmatprep.subr.bf16.mxu0 %v1222
    %1717 = vmatpush1.bf16.msra.mxu0 %v1221
    %1718 = vmatprep.subr.bf16.mxu0 %v1218
    %1719 = vmatpush1.bf16.msra.mxu0 %v1217
    %1720 = vmatprep.subr.bf16.mxu0 %v1214
    %1721 = vmatpush1.bf16.msra.mxu0 %v1213
    %1722 = vmatprep.subr.bf16.mxu0 %v1210
    %1723 = vmatpush1.bf16.msra.mxu0 %v1209
    %1724 = vmatprep.subr.bf16.mxu0 %v1206
    %1725 = vmatpush1.bf16.msra.mxu0 %v1205
    %1726 = vmatprep.subr.bf16.mxu0 %v1202
    %1727 = vmatpush1.bf16.msra.mxu0 %v1201
    %1728 = vmatprep.subr.bf16.mxu0 %v1262
    %1729 = vmatpush2.bf16.msra.mxu0 %v1261
    %1730 = vmatprep.subr.bf16.mxu0 %v1258
    %1731 = vmatpush2.bf16.msra.mxu0 %v1257
    %1732 = vmatprep.subr.bf16.mxu0 %v1254
    %1733 = vmatpush2.bf16.msra.mxu0 %v1253
    %1734 = vmatprep.subr.bf16.mxu0 %v1250
    %1735 = vmatpush2.bf16.msra.mxu0 %v1249
    %1736 = vmatprep.subr.bf16.mxu0 %v1246
    %1737 = vmatpush2.bf16.msra.mxu0 %v1245
    %1738 = vmatprep.subr.bf16.mxu0 %v1242
    %1739 = vmatpush2.bf16.msra.mxu0 %v1241
    %1740 = vmatprep.subr.bf16.mxu0 %v1238
    %1741 = vmatpush2.bf16.msra.mxu0 %v1237
    %1742 = vmatprep.subr.bf16.mxu0 %v1234
    %1743 = vmatpush2.bf16.msra.mxu0 %v1233
    %1744 = vmatprep.mubr.bf16.mxu0 %v359
    %1745 = vmatmul.mubr.bf16.gmra.mxu0 %v357
    %v1746 = vpop.f32.mrf.mxu0
    %v1747 = vadd.f32 %v1706, %v1746
    %v1748 = vpop.f32.mrf.mxu0
    %v1749 = vadd.f32 %v1708, %v1748
    %v1750 = vpop.f32.mrf.mxu0
    %v1751 = vpop.f32.mrf.mxu0
    %1752 = vdwg.mxu0
    %1753 = vmatprep.subr.bf16.mxu0 %v1294
    %1754 = vmatpush1.bf16.msra.mxu0 %v1293
    %1755 = vmatprep.subr.bf16.mxu0 %v1290
    %1756 = vmatpush1.bf16.msra.mxu0 %v1289
    %1757 = vmatprep.subr.bf16.mxu0 %v1286
    %1758 = vmatpush1.bf16.msra.mxu0 %v1285
    %1759 = vmatprep.subr.bf16.mxu0 %v1282
    %1760 = vmatpush1.bf16.msra.mxu0 %v1281
    %1761 = vmatprep.subr.bf16.mxu0 %v1278
    %1762 = vmatpush1.bf16.msra.mxu0 %v1277
    %1763 = vmatprep.subr.bf16.mxu0 %v1274
    %1764 = vmatpush1.bf16.msra.mxu0 %v1273
    %1765 = vmatprep.subr.bf16.mxu0 %v1270
    %1766 = vmatpush1.bf16.msra.mxu0 %v1269
    %1767 = vmatprep.subr.bf16.mxu0 %v1266
    %1768 = vmatpush1.bf16.msra.mxu0 %v1265
    %1769 = vmatprep.subr.bf16.mxu0 %v1326
    %1770 = vmatpush2.bf16.msra.mxu0 %v1325
    %1771 = vmatprep.subr.bf16.mxu0 %v1322
    %1772 = vmatpush2.bf16.msra.mxu0 %v1321
    %1773 = vmatprep.subr.bf16.mxu0 %v1318
    %1774 = vmatpush2.bf16.msra.mxu0 %v1317
    %1775 = vmatprep.subr.bf16.mxu0 %v1314
    %1776 = vmatpush2.bf16.msra.mxu0 %v1313
    %1777 = vmatprep.subr.bf16.mxu0 %v1310
    %1778 = vmatpush2.bf16.msra.mxu0 %v1309
    %1779 = vmatprep.subr.bf16.mxu0 %v1306
    %1780 = vmatpush2.bf16.msra.mxu0 %v1305
    %1781 = vmatprep.subr.bf16.mxu0 %v1302
    %1782 = vmatpush2.bf16.msra.mxu0 %v1301
    %1783 = vmatprep.subr.bf16.mxu0 %v1298
    %1784 = vmatpush2.bf16.msra.mxu0 %v1297
    %1785 = vmatprep.mubr.bf16.mxu0 %v356
    %1786 = vmatmul.mubr.bf16.gmra.mxu0 %v342
    %v1787 = vpop.f32.mrf.mxu0
    %v1788 = vadd.f32 %v1747, %v1787
    %v1789 = vpop.f32.mrf.mxu0
    %v1790 = vadd.f32 %v1749, %v1789
    %v1791 = vpop.f32.mrf.mxu0
    %v1792 = vpop.f32.mrf.mxu0
    %1793 = vdwg.mxu0
    %1794 = vmatprep.subr.bf16.mxu0 %v1358
    %1795 = vmatpush1.bf16.msra.mxu0 %v1357
    %1796 = vmatprep.subr.bf16.mxu0 %v1354
    %1797 = vmatpush1.bf16.msra.mxu0 %v1353
    %1798 = vmatprep.subr.bf16.mxu0 %v1350
    %1799 = vmatpush1.bf16.msra.mxu0 %v1349
    %1800 = vmatprep.subr.bf16.mxu0 %v1346
    %1801 = vmatpush1.bf16.msra.mxu0 %v1345
    %1802 = vmatprep.subr.bf16.mxu0 %v1342
    %1803 = vmatpush1.bf16.msra.mxu0 %v1341
    %1804 = vmatprep.subr.bf16.mxu0 %v1338
    %1805 = vmatpush1.bf16.msra.mxu0 %v1337
    %1806 = vmatprep.subr.bf16.mxu0 %v1334
    %1807 = vmatpush1.bf16.msra.mxu0 %v1333
    %1808 = vmatprep.subr.bf16.mxu0 %v1330
    %1809 = vmatpush1.bf16.msra.mxu0 %v1329
    %1810 = vmatprep.subr.bf16.mxu0 %v1390
    %1811 = vmatpush2.bf16.msra.mxu0 %v1389
    %1812 = vmatprep.subr.bf16.mxu0 %v1386
    %1813 = vmatpush2.bf16.msra.mxu0 %v1385
    %1814 = vmatprep.subr.bf16.mxu0 %v1382
    %1815 = vmatpush2.bf16.msra.mxu0 %v1381
    %1816 = vmatprep.subr.bf16.mxu0 %v1378
    %1817 = vmatpush2.bf16.msra.mxu0 %v1377
    %1818 = vmatprep.subr.bf16.mxu0 %v1374
    %1819 = vmatpush2.bf16.msra.mxu0 %v1373
    %1820 = vmatprep.subr.bf16.mxu0 %v1370
    %1821 = vmatpush2.bf16.msra.mxu0 %v1369
    %1822 = vmatprep.subr.bf16.mxu0 %v1366
    %1823 = vmatpush2.bf16.msra.mxu0 %v1365
    %1824 = vmatprep.subr.bf16.mxu0 %v1362
    %1825 = vmatpush2.bf16.msra.mxu0 %v1361
    %1826 = vmatprep.mubr.bf16.mxu0 %v360
    %1827 = vmatmul.mubr.bf16.gmra.mxu0 %v358
    %v1828 = vpop.f32.mrf.mxu0
    %v1829 = vadd.f32 %v1788, %v1828
    %v1830 = vpop.f32.mrf.mxu0
    %v1831 = vadd.f32 %v1790, %v1830
    %v1832 = vpop.f32.mrf.mxu0
    %v1833 = vpop.f32.mrf.mxu0
    %1834 = vdwg.mxu0
    %1835 = vmatprep.subr.bf16.mxu0 %v1168
    %1836 = vmatpush1.bf16.msra.mxu0 %v1167
    %1837 = vmatprep.subr.bf16.mxu0 %v1164
    %1838 = vmatpush1.bf16.msra.mxu0 %v1163
    %1839 = vmatprep.subr.bf16.mxu0 %v1160
    %1840 = vmatpush1.bf16.msra.mxu0 %v1159
    %1841 = vmatprep.subr.bf16.mxu0 %v1156
    %1842 = vmatpush1.bf16.msra.mxu0 %v1155
    %1843 = vmatprep.subr.bf16.mxu0 %v1152
    %1844 = vmatpush1.bf16.msra.mxu0 %v1151
    %1845 = vmatprep.subr.bf16.mxu0 %v1148
    %1846 = vmatpush1.bf16.msra.mxu0 %v1147
    %1847 = vmatprep.subr.bf16.mxu0 %v1144
    %1848 = vmatpush1.bf16.msra.mxu0 %v1143
    %1849 = vmatprep.subr.bf16.mxu0 %v1140
    %1850 = vmatpush1.bf16.msra.mxu0 %v1139
    %1851 = vmatprep.subr.bf16.mxu0 %v1200
    %1852 = vmatpush2.bf16.msra.mxu0 %v1199
    %1853 = vmatprep.subr.bf16.mxu0 %v1196
    %1854 = vmatpush2.bf16.msra.mxu0 %v1195
    %1855 = vmatprep.subr.bf16.mxu0 %v1192
    %1856 = vmatpush2.bf16.msra.mxu0 %v1191
    %1857 = vmatprep.subr.bf16.mxu0 %v1188
    %1858 = vmatpush2.bf16.msra.mxu0 %v1187
    %1859 = vmatprep.subr.bf16.mxu0 %v1184
    %1860 = vmatpush2.bf16.msra.mxu0 %v1183
    %1861 = vmatprep.subr.bf16.mxu0 %v1180
    %1862 = vmatpush2.bf16.msra.mxu0 %v1179
    %1863 = vmatprep.subr.bf16.mxu0 %v1176
    %1864 = vmatpush2.bf16.msra.mxu0 %v1175
    %1865 = vmatprep.subr.bf16.mxu0 %v1172
    %1866 = vmatpush2.bf16.msra.mxu0 %v1171
    %1867 = vmatprep.mubr.bf16.mxu0 %v349
    %1868 = vmatmul.mubr.bf16.gmra.mxu0 %v335
    %v1869 = vpop.f32.mrf.mxu0
    %v1870 = vadd.f32 %v1664, %v1869
    %v1871 = vpop.f32.mrf.mxu0
    %v1872 = vadd.f32 %v1666, %v1871
    %v1873 = vpop.f32.mrf.mxu0
    %v1874 = vpop.f32.mrf.mxu0
    %1875 = vdwg.mxu0
    %1876 = vmatprep.subr.bf16.mxu0 %v1232
    %1877 = vmatpush1.bf16.msra.mxu0 %v1231
    %1878 = vmatprep.subr.bf16.mxu0 %v1228
    %1879 = vmatpush1.bf16.msra.mxu0 %v1227
    %1880 = vmatprep.subr.bf16.mxu0 %v1224
    %1881 = vmatpush1.bf16.msra.mxu0 %v1223
    %1882 = vmatprep.subr.bf16.mxu0 %v1220
    %1883 = vmatpush1.bf16.msra.mxu0 %v1219
    %1884 = vmatprep.subr.bf16.mxu0 %v1216
    %1885 = vmatpush1.bf16.msra.mxu0 %v1215
    %1886 = vmatprep.subr.bf16.mxu0 %v1212
    %1887 = vmatpush1.bf16.msra.mxu0 %v1211
    %1888 = vmatprep.subr.bf16.mxu0 %v1208
    %1889 = vmatpush1.bf16.msra.mxu0 %v1207
    %1890 = vmatprep.subr.bf16.mxu0 %v1204
    %1891 = vmatpush1.bf16.msra.mxu0 %v1203
    %1892 = vmatprep.subr.bf16.mxu0 %v1264
    %1893 = vmatpush2.bf16.msra.mxu0 %v1263
    %1894 = vmatprep.subr.bf16.mxu0 %v1260
    %1895 = vmatpush2.bf16.msra.mxu0 %v1259
    %1896 = vmatprep.subr.bf16.mxu0 %v1256
    %1897 = vmatpush2.bf16.msra.mxu0 %v1255
    %1898 = vmatprep.subr.bf16.mxu0 %v1252
    %1899 = vmatpush2.bf16.msra.mxu0 %v1251
    %1900 = vmatprep.subr.bf16.mxu0 %v1248
    %1901 = vmatpush2.bf16.msra.mxu0 %v1247
    %1902 = vmatprep.subr.bf16.mxu0 %v1244
    %1903 = vmatpush2.bf16.msra.mxu0 %v1243
    %1904 = vmatprep.subr.bf16.mxu0 %v1240
    %1905 = vmatpush2.bf16.msra.mxu0 %v1239
    %1906 = vmatprep.subr.bf16.mxu0 %v1236
    %1907 = vmatpush2.bf16.msra.mxu0 %v1235
    %1908 = vmatprep.mubr.bf16.mxu0 %v359
    %1909 = vmatmul.mubr.bf16.gmra.mxu0 %v357
    %v1910 = vpop.f32.mrf.mxu0
    %v1911 = vadd.f32 %v1870, %v1910
    %v1912 = vpop.f32.mrf.mxu0
    %v1913 = vadd.f32 %v1872, %v1912
    %v1914 = vpop.f32.mrf.mxu0
    %v1915 = vpop.f32.mrf.mxu0
    %1916 = vdwg.mxu0
    %1917 = vmatprep.subr.bf16.mxu0 %v1296
    %1918 = vmatpush1.bf16.msra.mxu0 %v1295
    %1919 = vmatprep.subr.bf16.mxu0 %v1292
    %1920 = vmatpush1.bf16.msra.mxu0 %v1291
    %1921 = vmatprep.subr.bf16.mxu0 %v1288
    %1922 = vmatpush1.bf16.msra.mxu0 %v1287
    %1923 = vmatprep.subr.bf16.mxu0 %v1284
    %1924 = vmatpush1.bf16.msra.mxu0 %v1283
    %1925 = vmatprep.subr.bf16.mxu0 %v1280
    %1926 = vmatpush1.bf16.msra.mxu0 %v1279
    %1927 = vmatprep.subr.bf16.mxu0 %v1276
    %1928 = vmatpush1.bf16.msra.mxu0 %v1275
    %1929 = vmatprep.subr.bf16.mxu0 %v1272
    %1930 = vmatpush1.bf16.msra.mxu0 %v1271
    %1931 = vmatprep.subr.bf16.mxu0 %v1268
    %1932 = vmatpush1.bf16.msra.mxu0 %v1267
    %1933 = vmatprep.subr.bf16.mxu0 %v1328
    %1934 = vmatpush2.bf16.msra.mxu0 %v1327
    %1935 = vmatprep.subr.bf16.mxu0 %v1324
    %1936 = vmatpush2.bf16.msra.mxu0 %v1323
    %1937 = vmatprep.subr.bf16.mxu0 %v1320
    %1938 = vmatpush2.bf16.msra.mxu0 %v1319
    %1939 = vmatprep.subr.bf16.mxu0 %v1316
    %1940 = vmatpush2.bf16.msra.mxu0 %v1315
    %1941 = vmatprep.subr.bf16.mxu0 %v1312
    %1942 = vmatpush2.bf16.msra.mxu0 %v1311
    %1943 = vmatprep.subr.bf16.mxu0 %v1308
    %1944 = vmatpush2.bf16.msra.mxu0 %v1307
    %1945 = vmatprep.subr.bf16.mxu0 %v1304
    %1946 = vmatpush2.bf16.msra.mxu0 %v1303
    %1947 = vmatprep.subr.bf16.mxu0 %v1300
    %1948 = vmatpush2.bf16.msra.mxu0 %v1299
    %1949 = vmatprep.mubr.bf16.mxu0 %v356
    %1950 = vmatmul.mubr.bf16.gmra.mxu0 %v342
    %v1951 = vpop.f32.mrf.mxu0
    %v1952 = vadd.f32 %v1911, %v1951
    %v1953 = vpop.f32.mrf.mxu0
    %v1954 = vadd.f32 %v1913, %v1953
    %v1955 = vpop.f32.mrf.mxu0
    %v1956 = vpop.f32.mrf.mxu0
    %1957 = vdwg.mxu0
    %1958 = vmatprep.subr.bf16.mxu0 %v1360
    %1959 = vmatpush1.bf16.msra.mxu0 %v1359
    %1960 = vmatprep.subr.bf16.mxu0 %v1356
    %1961 = vmatpush1.bf16.msra.mxu0 %v1355
    %1962 = vmatprep.subr.bf16.mxu0 %v1352
    %1963 = vmatpush1.bf16.msra.mxu0 %v1351
    %1964 = vmatprep.subr.bf16.mxu0 %v1348
    %1965 = vmatpush1.bf16.msra.mxu0 %v1347
    %1966 = vmatprep.subr.bf16.mxu0 %v1344
    %1967 = vmatpush1.bf16.msra.mxu0 %v1343
    %1968 = vmatprep.subr.bf16.mxu0 %v1340
    %1969 = vmatpush1.bf16.msra.mxu0 %v1339
    %1970 = vmatprep.subr.bf16.mxu0 %v1336
    %1971 = vmatpush1.bf16.msra.mxu0 %v1335
    %1972 = vmatprep.subr.bf16.mxu0 %v1332
    %1973 = vmatpush1.bf16.msra.mxu0 %v1331
    %1974 = vmatprep.subr.bf16.mxu0 %v1392
    %1975 = vmatpush2.bf16.msra.mxu0 %v1391
    %1976 = vmatprep.subr.bf16.mxu0 %v1388
    %1977 = vmatpush2.bf16.msra.mxu0 %v1387
    %1978 = vmatprep.subr.bf16.mxu0 %v1384
    %1979 = vmatpush2.bf16.msra.mxu0 %v1383
    %1980 = vmatprep.subr.bf16.mxu0 %v1380
    %1981 = vmatpush2.bf16.msra.mxu0 %v1379
    %1982 = vmatprep.subr.bf16.mxu0 %v1376
    %1983 = vmatpush2.bf16.msra.mxu0 %v1375
    %1984 = vmatprep.subr.bf16.mxu0 %v1372
    %1985 = vmatpush2.bf16.msra.mxu0 %v1371
    %1986 = vmatprep.subr.bf16.mxu0 %v1368
    %1987 = vmatpush2.bf16.msra.mxu0 %v1367
    %1988 = vmatprep.subr.bf16.mxu0 %v1364
    %1989 = vmatpush2.bf16.msra.mxu0 %v1363
    %1990 = vmatprep.mubr.bf16.mxu0 %v360
    %1991 = vmatmul.mubr.bf16.gmra.mxu0 %v358
    %v1992 = vpop.f32.mrf.mxu0
    %v1993 = vadd.f32 %v1952, %v1992
    %v1994 = vpop.f32.mrf.mxu0
    %v1995 = vadd.f32 %v1954, %v1994
    %v1996 = vpop.f32.mrf.mxu0
    %v1997 = vpop.f32.mrf.mxu0
    %1998 = vdwg.mxu0
    %v1999 = vmax.f32 %v1829, 0.0
    %v2000 = vmax.f32 %v1831, 0.0
    %v2001 = vmax.f32 %v1993, 0.0
    %v2002 = vmax.f32 %v1995, 0.0
    %v2007 = vcombine.low %v1999, %v2000
    %v2008 = vcombine.low %v2001, %v2002
    %v2010 = vunpack.c.l.s4 1983009808
    %v2011 = vunpack.c.0.s8 %v2010
    %v2012 = vlaneseq
    %v2013 = vshrl.u32 %v2012, 7
    %v2014 = vsub.s32 %v2011, %v2013
    %v2015 = vrot.slane %v2007, %v2014
    %v2017 = vunpack.c.l.s4 1983009808
    %v2018 = vunpack.c.0.s8 %v2017
    %v2019 = vlaneseq
    %v2020 = vshrl.u32 %v2019, 7
    %v2021 = vsub.s32 %v2018, %v2020
    %v2022 = vrot.slane %v2008, %v2021
    %v2023 = vcombine.low %v2015, %v2022
    %2025 = vst [vmem:[#allocation8] sm:$0xff] %v2023
    // Predicated region
    $region26: #{tpu_custom_call.1} parent=1 // pred_check
      _
    $region27: #{tpu_custom_call.1} parent=1 // pred_check_branch
      %2027 = sbr.rel (0) target = $region29
    $region28: #{tpu_custom_call.1} parent=1 // pred_region
      %s2029 = ssub.s32 128, 128
      %2030 = vsyncadd [#allocation4], %s2029
      %s2032 = sshll.u32 [#allocation8], 4
      %s2033 = int_to_ptr.vmem [resolvable:$true] %s2032
      %2035 = dma.vmem_to_hbm [thread:$0]  %s2033, 128, %s3, [#allocation4]
    $region29: #{tpu_custom_call.1} parent=1 // pred_fallthru
      _
    // Predicated region
    $region30: #{tpu_custom_call.1} parent=1 // pred_check
      _
    $region31: #{tpu_custom_call.1} parent=1 // pred_check_branch
      %2037 = sbr.rel (0) target = $region33
    $region32: #{tpu_custom_call.1} parent=1 // pred_region
      %2038 = dma.done [#allocation4], 128
    $region33: #{tpu_custom_call.1} parent=1 // pred_fallthru
      _
    %2039 = vsyncpa [#allocation3], 1
    %2040 = vsyncpa [#allocation6], 1
    %2041 = vsyncpa [#allocation4], 1

</llo_original>
